<compile_context>
chip_gen: v7x
topology: tpu7x:2x2x1
jax: 0.10.0
libtpu: 0.0.40
codegen_flags: <defaults>
</compile_context>

<pallas_src>
import functools
import numpy as np
import jax
import jax.numpy as jnp
from jax.experimental import pallas as pl
from jax.experimental.pallas import tpu as pltpu


def _bilinear_matrix(in_size: int, out_size: int) -> np.ndarray:
    """Static interpolation matrix A (out, in) for align_corners=True bilinear resize."""
    A = np.zeros((out_size, in_size), dtype=np.float32)
    if out_size == 1:
        A[0, 0] = 1.0
        return A
    scale = (in_size - 1) / (out_size - 1)
    for o in range(out_size):
        src = o * scale
        i0 = int(np.floor(src))
        i1 = min(i0 + 1, in_size - 1)
        frac = src - i0
        A[o, i0] += 1.0 - frac
        A[o, i1] += frac
    return A


def _padded(A: np.ndarray) -> np.ndarray:
    """Zero row above/below: realizes the conv's padding=1 on the upsampled grid."""
    out = np.zeros((A.shape[0] + 2, A.shape[1]), dtype=np.float32)
    out[1:-1] = A
    return out


@functools.lru_cache(maxsize=None)
def _static_operators(H, W, Cin, Cout):
    """Shape-only operators, built once per shape (hoisted off the per-call path)."""
    Hout, Wout = 2 * H, 2 * W
    A_h = _padded(_bilinear_matrix(H, Hout))                    # (Hout+2, H)
    A_w = _padded(_bilinear_matrix(W, Wout))                    # (Wout+2, W)
    S_h = np.stack([A_h[d:d + Hout] for d in range(3)], 0)      # (3, Hout, H)
    S_w = np.stack([A_w[d:d + Wout] for d in range(3)], 0)      # (3, Wout, W)
    # Vertical operator, all 3 taps concatenated along K: (Hout, 3*H).
    lv_cat = np.concatenate([S_h[0], S_h[1], S_h[2]], axis=1)
    # 0/1 lane->channel reducer (WoCo, Cout); its transpose broadcasts channel->lane.
    lane_ch = np.arange(Wout * Cout) % Cout
    q = (lane_ch[:, None] == np.arange(Cout)[None, :]).astype(np.float32)
    return lv_cat, S_w, q


def upconv_conv_stats_kernel(x_ref, lv_ref, rh_ref, q_ref, qt_ref,
                             y_ref, stats_ref, t_ref):
    # x_ref:     (H, W*Cin)          bf16, one batch element (grid over N)
    # lv_ref:    (Hout, 3*H)         bf16, vertical upsample + 3 conv taps, concatenated
    # rh_ref:    (3, W*Cin, Wout*Cout) bf16, per-tap {W-upsample, horiz taps, Cin->Cout}
    # q_ref:     (Wout*Cout, Cout)   f32 0/1 lane->channel reduce
    # qt_ref:    (Cout, Wout*Cout)   f32 0/1 channel->lane broadcast
    # y_ref:     (Hout, Wout*Cout)   f32 conv output slab for this batch element
    # stats_ref: (1, 2, Cout)        f32 [channel mean; centered sum-of-squares]
    # t_ref:     (3*H, Wout*Cout)    bf16 scratch: the three first-stage products stacked
    H = x_ref.shape[0]
    x = x_ref[...]

    # First stage: three lane-dense matmuls (K = W*Cin), stacked along scratch rows.
    for dy in range(3):
        t_ref[dy * H:(dy + 1) * H, :] = jnp.dot(
            x, rh_ref[dy], preferred_element_type=jnp.float32
        ).astype(t_ref.dtype)

    # Second stage: ONE matmul with K = 3*H (was 3 matmuls with K = H).
    y = jnp.dot(lv_ref[...], t_ref[...], preferred_element_type=jnp.float32)
    y_ref[...] = y

    # Per-block centered BN partial stats (all f32); blocks are merged in the wrapper
    # with Chan's parallel-variance formula, avoiding E[x^2]-E[x]^2 cancellation.
    cout = q_ref.shape[1]
    inv_cnt = 1.0 / float(y.shape[0] * (y.shape[1] // cout))
    row_sum = jnp.sum(y, axis=0, keepdims=True)                          # (1, WoCo)
    ch_mean = jnp.dot(row_sum, q_ref[...],
                      preferred_element_type=jnp.float32) * inv_cnt      # (1, Cout)
    mean_lane = jnp.dot(ch_mean, qt_ref[...],
                        preferred_element_type=jnp.float32)              # (1, WoCo)
    centered = y - mean_lane
    ch_sq = jnp.dot(jnp.sum(centered * centered, axis=0, keepdims=True),
                    q_ref[...], preferred_element_type=jnp.float32)      # (1, Cout)
    stats_ref[0, 0:1, :] = ch_mean
    stats_ref[0, 1:2, :] = ch_sq


def bn_relu_kernel(y_ref, scale_ref, shift_ref, o_ref):
    # Second BN pass: apply the batch-wide scale/shift, then ReLU. Pure VPU, f32.
    o_ref[...] = jnp.maximum(y_ref[...] * scale_ref[...] + shift_ref[...], 0.0)


@jax.jit
def upconv_block(x_nchw, conv_w, gamma, beta):
    """Forward pass of UpConvBlock. x_nchw: (N,Cin,H,W) -> (N,Cout,2H,2W)."""
    N, Cin, H, W = x_nchw.shape
    Cout = conv_w.shape[0]
    Hout, Wout = 2 * H, 2 * W
    WCi, WoCo = W * Cin, Wout * Cout

    lv_np, S_w_np, q_np = _static_operators(H, W, Cin, Cout)
    lv = jnp.asarray(lv_np, dtype=jnp.bfloat16)                 # (Hout, 3*H)
    q = jnp.asarray(q_np)                                       # (WoCo, Cout)
    qt = jnp.asarray(np.ascontiguousarray(q_np.T))              # (Cout, WoCo)

    # Fold {W-upsample, horizontal taps, Cin->Cout} into per-tap right operators.
    rh = jnp.einsum('dpw,oivd->vwipo', jnp.asarray(S_w_np),
                    conv_w.astype(jnp.float32)).reshape(3, WCi, WoCo).astype(jnp.bfloat16)

    # glue: NCHW -> lane-dense (N*H, W*Cin) slab (NHWC flattening), bf16 for the MXU.
    x2d = jnp.transpose(x_nchw, (0, 2, 3, 1)).reshape(N * H, WCi).astype(jnp.bfloat16)

    conv_slab, stats = pl.pallas_call(
        upconv_conv_stats_kernel,
        out_shape=(jax.ShapeDtypeStruct((N * Hout, WoCo), jnp.float32),
                   jax.ShapeDtypeStruct((N, 2, Cout), jnp.float32)),
        grid=(N,),
        in_specs=[
            pl.BlockSpec((H, WCi), lambda n: (n, 0)),
            pl.BlockSpec((Hout, 3 * H), lambda n: (0, 0)),
            pl.BlockSpec((3, WCi, WoCo), lambda n: (0, 0, 0)),
            pl.BlockSpec((WoCo, Cout), lambda n: (0, 0)),
            pl.BlockSpec((Cout, WoCo), lambda n: (0, 0)),
        ],
        out_specs=(
            pl.BlockSpec((Hout, WoCo), lambda n: (n, 0)),
            pl.BlockSpec((1, 2, Cout), lambda n: (n, 0, 0)),
        ),
        scratch_shapes=[pltpu.VMEM((3 * H, WoCo), jnp.bfloat16)],
        compiler_params=pltpu.CompilerParams(dimension_semantics=("parallel",)),
    )(x2d, lv, rh, q, qt)

    # Finalize batch statistics (Chan combine of per-block centered stats; tiny arrays).
    m_b = stats[:, 0, :]                                        # (N, Cout) block means
    s_b = stats[:, 1, :]                                        # (N, Cout) centered sumsq
    n_b = float(Hout * Wout)
    mean = jnp.mean(m_b, axis=0)                                # (Cout,)
    m2 = jnp.sum(s_b, axis=0) + n_b * jnp.sum((m_b - mean[None, :]) ** 2, axis=0)
    var = m2 / (N * n_b)                                        # biased batch variance
    scale = gamma.astype(jnp.float32) * jax.lax.rsqrt(var + 1e-5)
    shift = beta.astype(jnp.float32) - mean * scale
    scale_t = jnp.tile(scale, Wout).reshape(1, WoCo)
    shift_t = jnp.tile(shift, Wout).reshape(1, WoCo)
    # TODO(synk): PyTorch training-mode BN also updates running_mean/var; that module
    # state side effect is not modeled here (forward output only).

    out_slab = pl.pallas_call(
        bn_relu_kernel,
        out_shape=jax.ShapeDtypeStruct((N * Hout, WoCo), jnp.float32),
        grid=(N,),
        in_specs=[
            pl.BlockSpec((Hout, WoCo), lambda n: (n, 0)),
            pl.BlockSpec((1, WoCo), lambda n: (0, 0)),
            pl.BlockSpec((1, WoCo), lambda n: (0, 0)),
        ],
        out_specs=pl.BlockSpec((Hout, WoCo), lambda n: (n, 0)),
        compiler_params=pltpu.CompilerParams(dimension_semantics=("parallel",)),
    )(conv_slab, scale_t, shift_t)

    # glue: lane-dense slab -> NHWC -> NCHW to match the PyTorch output convention.
    return jnp.transpose(out_slab.reshape(N, Hout, Wout, Cout), (0, 3, 1, 2))


def upconv_ref(x_nchw, conv_w, gamma, beta):
    """Pure-JAX reference of the same forward (correctness check)."""
    N, Cin, H, W = x_nchw.shape
    Hout, Wout = 2 * H, 2 * W
    A_h = jnp.asarray(_bilinear_matrix(H, Hout))
    A_w = jnp.asarray(_bilinear_matrix(W, Wout))
    x = jnp.einsum('oh,nchw->ncow', A_h, x_nchw.astype(jnp.float32))
    x = jnp.einsum('pw,ncow->ncop', A_w, x)
    y = jax.lax.conv_general_dilated(
        x, conv_w.astype(jnp.float32), (1, 1), ((1, 1), (1, 1)),
        dimension_numbers=('NCHW', 'OIHW', 'NCHW'))
    mean = jnp.mean(y, axis=(0, 2, 3), keepdims=True)
    var = jnp.mean((y - mean) ** 2, axis=(0, 2, 3), keepdims=True)
    y = (y - mean) * jax.lax.rsqrt(var + 1e-5)
    y = y * gamma.reshape(1, -1, 1, 1) + beta.reshape(1, -1, 1, 1)
    return jnp.maximum(y, 0.0)


if __name__ == "__main__":
    key = jax.random.PRNGKey(0)
    k1, k2, k3, k4 = jax.random.split(key, 4)
    N, Cin, Cout, H, W = 2, 4, 8, 16, 16

    x = jax.random.normal(k1, (N, Cin, H, W), jnp.float32)
    conv_w = 0.1 * jax.random.normal(k2, (Cout, Cin, 3, 3), jnp.float32)
    gamma = 1.0 + 0.1 * jax.random.normal(k3, (Cout,), jnp.float32)
    beta = 0.1 * jax.random.normal(k4, (Cout,), jnp.float32)

    out = jax.block_until_ready(upconv_block(x, conv_w, gamma, beta))

    ref = upconv_ref(x, conv_w, gamma, beta)
    assert out.shape == (N, Cout, 2 * H, 2 * W), out.shape
    # bf16 MXU operands (f32 accumulate) sit comfortably inside this tolerance.
    assert bool(jnp.allclose(out, ref, atol=2e-2, rtol=2e-2)), \
        float(jnp.max(jnp.abs(out - ref)))
    print("KERNEL_OK")
</pallas_src>

<mosaic_0001>
module attributes {stable_mosaic.version = 11 : i64} {
  func.func @upconv_conv_stats_kernel(%arg0: i32, %arg1: memref<16x64xbf16, #tpu.memory_space<vmem>>, %arg2: memref<32x48xbf16, #tpu.memory_space<vmem>>, %arg3: memref<3x64x256xbf16, #tpu.memory_space<vmem>>, %arg4: memref<256x8xf32, #tpu.memory_space<vmem>>, %arg5: memref<8x256xf32, #tpu.memory_space<vmem>>, %arg6: memref<32x256xf32, #tpu.memory_space<vmem>>, %arg7: memref<1x2x8xf32, #tpu.memory_space<vmem>>, %arg8: memref<48x256xbf16, #tpu.memory_space<vmem>>) attributes {dimension_semantics = [#tpu.dimension_semantics<parallel>], iteration_bounds = array<i64: 2>, scalar_prefetch = 0 : i64, scratch_operands = 1 : i64, tpu.core_type = #tpu.core_type<tc>, window_params = [{transform_indices = @transform_0, window_bounds = array<i64: 16, 64>}, {pipeline_mode = #tpu.pipeline_mode<synchronous>, transform_indices = @transform_1, window_bounds = array<i64: 32, 48>}, {pipeline_mode = #tpu.pipeline_mode<synchronous>, transform_indices = @transform_2, window_bounds = array<i64: 3, 64, 256>}, {pipeline_mode = #tpu.pipeline_mode<synchronous>, transform_indices = @transform_3, window_bounds = array<i64: 256, 8>}, {pipeline_mode = #tpu.pipeline_mode<synchronous>, transform_indices = @transform_4, window_bounds = array<i64: 8, 256>}, {transform_indices = @transform_5, window_bounds = array<i64: 32, 256>}, {transform_indices = @transform_6, window_bounds = array<i64: 1, 2, 8>}]} {
    %c0 = arith.constant 0 : index
    %c0_0 = arith.constant 0 : index
    %0 = vector.load %arg1[%c0, %c0_0] : memref<16x64xbf16, #tpu.memory_space<vmem>>, vector<16x64xbf16>
    %c0_1 = arith.constant 0 : index
    %c0_2 = arith.constant 0 : index
    %c0_3 = arith.constant 0 : index
    %1 = vector.load %arg3[%c0_1, %c0_2, %c0_3] : memref<3x64x256xbf16, #tpu.memory_space<vmem>>, vector<1x64x256xbf16>
    %2 = vector.shape_cast %1 : vector<1x64x256xbf16> to vector<64x256xbf16>
    %cst = arith.constant dense<0.000000e+00> : vector<16x256xf32>
    %3 = tpu.matmul %0, %2, %cst {dimension_numbers = #tpu.dot_dimension_numbers<[1], [0], [0], [1], [0, 0, 1, 1], [], []>} : vector<16x64xbf16>, vector<64x256xbf16>, vector<16x256xf32> -> vector<16x256xf32>
    %4 = arith.truncf %3 : vector<16x256xf32> to vector<16x256xbf16>
    %c0_4 = arith.constant 0 : index
    %c0_5 = arith.constant 0 : index
    %5 = vector.load %arg8[%c0_4, %c0_5] : memref<48x256xbf16, #tpu.memory_space<vmem>>, vector<16x256xbf16>
    tpu.vector_store %arg8[%c0_4, %c0_5], %4 {strides = array<i32>} : memref<48x256xbf16, #tpu.memory_space<vmem>>, vector<16x256xbf16>,
    %c1 = arith.constant 1 : index
    %c0_6 = arith.constant 0 : index
    %c0_7 = arith.constant 0 : index
    %6 = vector.load %arg3[%c1, %c0_6, %c0_7] : memref<3x64x256xbf16, #tpu.memory_space<vmem>>, vector<1x64x256xbf16>
    %7 = vector.shape_cast %6 : vector<1x64x256xbf16> to vector<64x256xbf16>
    %cst_8 = arith.constant dense<0.000000e+00> : vector<16x256xf32>
    %8 = tpu.matmul %0, %7, %cst_8 {dimension_numbers = #tpu.dot_dimension_numbers<[1], [0], [0], [1], [0, 0, 1, 1], [], []>} : vector<16x64xbf16>, vector<64x256xbf16>, vector<16x256xf32> -> vector<16x256xf32>
    %9 = arith.truncf %8 : vector<16x256xf32> to vector<16x256xbf16>
    %c16 = arith.constant 16 : index
    %c0_9 = arith.constant 0 : index
    %10 = vector.load %arg8[%c16, %c0_9] : memref<48x256xbf16, #tpu.memory_space<vmem>>, vector<16x256xbf16>
    tpu.vector_store %arg8[%c16, %c0_9], %9 {strides = array<i32>} : memref<48x256xbf16, #tpu.memory_space<vmem>>, vector<16x256xbf16>,
    %c2 = arith.constant 2 : index
    %c0_10 = arith.constant 0 : index
    %c0_11 = arith.constant 0 : index
    %11 = vector.load %arg3[%c2, %c0_10, %c0_11] : memref<3x64x256xbf16, #tpu.memory_space<vmem>>, vector<1x64x256xbf16>
    %12 = vector.shape_cast %11 : vector<1x64x256xbf16> to vector<64x256xbf16>
    %cst_12 = arith.constant dense<0.000000e+00> : vector<16x256xf32>
    %13 = tpu.matmul %0, %12, %cst_12 {dimension_numbers = #tpu.dot_dimension_numbers<[1], [0], [0], [1], [0, 0, 1, 1], [], []>} : vector<16x64xbf16>, vector<64x256xbf16>, vector<16x256xf32> -> vector<16x256xf32>
    %14 = arith.truncf %13 : vector<16x256xf32> to vector<16x256xbf16>
    %c32 = arith.constant 32 : index
    %c0_13 = arith.constant 0 : index
    %15 = vector.load %arg8[%c32, %c0_13] : memref<48x256xbf16, #tpu.memory_space<vmem>>, vector<16x256xbf16>
    tpu.vector_store %arg8[%c32, %c0_13], %14 {strides = array<i32>} : memref<48x256xbf16, #tpu.memory_space<vmem>>, vector<16x256xbf16>,
    %c0_14 = arith.constant 0 : index
    %c0_15 = arith.constant 0 : index
    %16 = vector.load %arg2[%c0_14, %c0_15] : memref<32x48xbf16, #tpu.memory_space<vmem>>, vector<32x48xbf16>
    %c0_16 = arith.constant 0 : index
    %c0_17 = arith.constant 0 : index
    %17 = vector.load %arg8[%c0_16, %c0_17] : memref<48x256xbf16, #tpu.memory_space<vmem>>, vector<48x256xbf16>
    %cst_18 = arith.constant dense<0.000000e+00> : vector<32x256xf32>
    %18 = tpu.matmul %16, %17, %cst_18 {dimension_numbers = #tpu.dot_dimension_numbers<[1], [0], [0], [1], [0, 0, 1, 1], [], []>} : vector<32x48xbf16>, vector<48x256xbf16>, vector<32x256xf32> -> vector<32x256xf32>
    %c0_19 = arith.constant 0 : index
    %c0_20 = arith.constant 0 : index
    %19 = vector.load %arg6[%c0_19, %c0_20] : memref<32x256xf32, #tpu.memory_space<vmem>>, vector<32x256xf32>
    tpu.vector_store %arg6[%c0_19, %c0_20], %18 {strides = array<i32>} : memref<32x256xf32, #tpu.memory_space<vmem>>, vector<32x256xf32>,
    %cst_21 = arith.constant dense<0.000000e+00> : vector<256xf32>
    %20 = vector.multi_reduction <add>, %18, %cst_21 [0] : vector<32x256xf32> to vector<256xf32>
    %21 = vector.shape_cast %20 : vector<256xf32> to vector<1x256xf32>
    %c0_22 = arith.constant 0 : index
    %c0_23 = arith.constant 0 : index
    %22 = vector.load %arg4[%c0_22, %c0_23] : memref<256x8xf32, #tpu.memory_space<vmem>>, vector<256x8xf32>
    %cst_24 = arith.constant dense<0.000000e+00> : vector<1x8xf32>
    %23 = tpu.matmul %21, %22, %cst_24 {dimension_numbers = #tpu.dot_dimension_numbers<[1], [0], [0], [1], [0, 0, 1, 1], [], []>} : vector<1x256xf32>, vector<256x8xf32>, vector<1x8xf32> -> vector<1x8xf32>
    %cst_25 = arith.constant 9.765625E-4 : f32
    %24 = vector.broadcast %cst_25 : f32 to vector<1x8xf32>
    %25 = arith.mulf %23, %24 : vector<1x8xf32>
    %c0_26 = arith.constant 0 : index
    %c0_27 = arith.constant 0 : index
    %26 = vector.load %arg5[%c0_26, %c0_27] : memref<8x256xf32, #tpu.memory_space<vmem>>, vector<8x256xf32>
    %cst_28 = arith.constant dense<0.000000e+00> : vector<1x256xf32>
    %27 = tpu.matmul %25, %26, %cst_28 {dimension_numbers = #tpu.dot_dimension_numbers<[1], [0], [0], [1], [0, 0, 1, 1], [], []>} : vector<1x8xf32>, vector<8x256xf32>, vector<1x256xf32> -> vector<1x256xf32>
    %28 = vector.broadcast %27 : vector<1x256xf32> to vector<32x256xf32>
    %29 = arith.subf %18, %28 : vector<32x256xf32>
    %30 = arith.mulf %29, %29 : vector<32x256xf32>
    %cst_29 = arith.constant dense<0.000000e+00> : vector<256xf32>
    %31 = vector.multi_reduction <add>, %30, %cst_29 [0] : vector<32x256xf32> to vector<256xf32>
    %32 = vector.shape_cast %31 : vector<256xf32> to vector<1x256xf32>
    %c0_30 = arith.constant 0 : index
    %c0_31 = arith.constant 0 : index
    %33 = vector.load %arg4[%c0_30, %c0_31] : memref<256x8xf32, #tpu.memory_space<vmem>>, vector<256x8xf32>
    %cst_32 = arith.constant dense<0.000000e+00> : vector<1x8xf32>
    %34 = tpu.matmul %32, %33, %cst_32 {dimension_numbers = #tpu.dot_dimension_numbers<[1], [0], [0], [1], [0, 0, 1, 1], [], []>} : vector<1x256xf32>, vector<256x8xf32>, vector<1x8xf32> -> vector<1x8xf32>
    %c0_33 = arith.constant 0 : index
    %c0_34 = arith.constant 0 : index
    %c0_35 = arith.constant 0 : index
    %35 = vector.load %arg7[%c0_33, %c0_34, %c0_35] : memref<1x2x8xf32, #tpu.memory_space<vmem>>, vector<1x1x8xf32>
    %36 = vector.shape_cast %35 : vector<1x1x8xf32> to vector<1x8xf32>
    %37 = vector.shape_cast %25 : vector<1x8xf32> to vector<1x1x8xf32>
    tpu.vector_store %arg7[%c0_33, %c0_34, %c0_35], %37 {strides = array<i32>} : memref<1x2x8xf32, #tpu.memory_space<vmem>>, vector<1x1x8xf32>,
    %c0_36 = arith.constant 0 : index
    %c1_37 = arith.constant 1 : index
    %c0_38 = arith.constant 0 : index
    %38 = vector.load %arg7[%c0_36, %c1_37, %c0_38] : memref<1x2x8xf32, #tpu.memory_space<vmem>>, vector<1x1x8xf32>
    %39 = vector.shape_cast %38 : vector<1x1x8xf32> to vector<1x8xf32>
    %40 = vector.shape_cast %34 : vector<1x8xf32> to vector<1x1x8xf32>
    tpu.vector_store %arg7[%c0_36, %c1_37, %c0_38], %40 {strides = array<i32>} : memref<1x2x8xf32, #tpu.memory_space<vmem>>, vector<1x1x8xf32>,
    return
  }
  func.func @transform_0(%arg0: i32) -> (i32, i32) {
    %c0_i32 = arith.constant 0 : i32
    %c0_i32_0 = arith.constant 0 : i32
    return %arg0, %c0_i32 : i32, i32
  }
  func.func @transform_1(%arg0: i32) -> (i32, i32) {
    %c0_i32 = arith.constant 0 : i32
    %c0_i32_0 = arith.constant 0 : i32
    %c0_i32_1 = arith.constant 0 : i32
    return %c0_i32, %c0_i32_0 : i32, i32
  }
  func.func @transform_2(%arg0: i32) -> (i32, i32, i32) {
    %c0_i32 = arith.constant 0 : i32
    %c0_i32_0 = arith.constant 0 : i32
    %c0_i32_1 = arith.constant 0 : i32
    %c0_i32_2 = arith.constant 0 : i32
    return %c0_i32, %c0_i32_0, %c0_i32_1 : i32, i32, i32
  }
  func.func @transform_3(%arg0: i32) -> (i32, i32) {
    %c0_i32 = arith.constant 0 : i32
    %c0_i32_0 = arith.constant 0 : i32
    %c0_i32_1 = arith.constant 0 : i32
    return %c0_i32, %c0_i32_0 : i32, i32
  }
  func.func @transform_4(%arg0: i32) -> (i32, i32) {
    %c0_i32 = arith.constant 0 : i32
    %c0_i32_0 = arith.constant 0 : i32
    %c0_i32_1 = arith.constant 0 : i32
    return %c0_i32, %c0_i32_0 : i32, i32
  }
  func.func @transform_5(%arg0: i32) -> (i32, i32) {
    %c0_i32 = arith.constant 0 : i32
    %c0_i32_0 = arith.constant 0 : i32
    return %arg0, %c0_i32 : i32, i32
  }
  func.func @transform_6(%arg0: i32) -> (i32, i32, i32) {
    %c0_i32 = arith.constant 0 : i32
    %c0_i32_0 = arith.constant 0 : i32
    %c0_i32_1 = arith.constant 0 : i32
    return %arg0, %c0_i32, %c0_i32_0 : i32, i32, i32
  }
}

module attributes {stable_mosaic.version = 11 : i64} {
  func.func @bn_relu_kernel(%arg0: i32, %arg1: memref<32x256xf32, #tpu.memory_space<vmem>>, %arg2: memref<1x256xf32, #tpu.memory_space<vmem>>, %arg3: memref<1x256xf32, #tpu.memory_space<vmem>>, %arg4: memref<32x256xf32, #tpu.memory_space<vmem>>) attributes {dimension_semantics = [#tpu.dimension_semantics<parallel>], iteration_bounds = array<i64: 2>, scalar_prefetch = 0 : i64, scratch_operands = 0 : i64, tpu.core_type = #tpu.core_type<tc>, window_params = [{transform_indices = @transform_0, window_bounds = array<i64: 32, 256>}, {pipeline_mode = #tpu.pipeline_mode<synchronous>, transform_indices = @transform_1, window_bounds = array<i64: 1, 256>}, {pipeline_mode = #tpu.pipeline_mode<synchronous>, transform_indices = @transform_2, window_bounds = array<i64: 1, 256>}, {transform_indices = @transform_3, window_bounds = array<i64: 32, 256>}]} {
    %c0 = arith.constant 0 : index
    %c0_0 = arith.constant 0 : index
    %0 = vector.load %arg1[%c0, %c0_0] : memref<32x256xf32, #tpu.memory_space<vmem>>, vector<32x256xf32>
    %c0_1 = arith.constant 0 : index
    %c0_2 = arith.constant 0 : index
    %1 = vector.load %arg2[%c0_1, %c0_2] : memref<1x256xf32, #tpu.memory_space<vmem>>, vector<1x256xf32>
    %2 = vector.broadcast %1 : vector<1x256xf32> to vector<32x256xf32>
    %3 = arith.mulf %0, %2 : vector<32x256xf32>
    %c0_3 = arith.constant 0 : index
    %c0_4 = arith.constant 0 : index
    %4 = vector.load %arg3[%c0_3, %c0_4] : memref<1x256xf32, #tpu.memory_space<vmem>>, vector<1x256xf32>
    %5 = vector.broadcast %4 : vector<1x256xf32> to vector<32x256xf32>
    %6 = arith.addf %3, %5 : vector<32x256xf32>
    %cst = arith.constant 0.000000e+00 : f32
    %7 = vector.broadcast %cst : f32 to vector<32x256xf32>
    %8 = arith.maximumf %6, %7 : vector<32x256xf32>
    %c0_5 = arith.constant 0 : index
    %c0_6 = arith.constant 0 : index
    %9 = vector.load %arg4[%c0_5, %c0_6] : memref<32x256xf32, #tpu.memory_space<vmem>>, vector<32x256xf32>
    tpu.vector_store %arg4[%c0_5, %c0_6], %8 {strides = array<i32>} : memref<32x256xf32, #tpu.memory_space<vmem>>, vector<32x256xf32>,
    return
  }
  func.func @transform_0(%arg0: i32) -> (i32, i32) {
    %c0_i32 = arith.constant 0 : i32
    %c0_i32_0 = arith.constant 0 : i32
    return %arg0, %c0_i32 : i32, i32
  }
  func.func @transform_1(%arg0: i32) -> (i32, i32) {
    %c0_i32 = arith.constant 0 : i32
    %c0_i32_0 = arith.constant 0 : i32
    %c0_i32_1 = arith.constant 0 : i32
    return %c0_i32, %c0_i32_0 : i32, i32
  }
  func.func @transform_2(%arg0: i32) -> (i32, i32) {
    %c0_i32 = arith.constant 0 : i32
    %c0_i32_0 = arith.constant 0 : i32
    %c0_i32_1 = arith.constant 0 : i32
    return %c0_i32, %c0_i32_0 : i32, i32
  }
  func.func @transform_3(%arg0: i32) -> (i32, i32) {
    %c0_i32 = arith.constant 0 : i32
    %c0_i32_0 = arith.constant 0 : i32
    return %arg0, %c0_i32 : i32, i32
  }
}

</mosaic_0001>

<llo_original>
// kernel: tile.13
$region0: #{tile.13}
  #allocation0 [shape = 's32[1]{0}', space=sflag, size = 0x4, scoped, tag = 'scoped memory for tile.13']
  %s0 = inlined_call_operand.vmem [shape: f32[8], index: 0, kind: input, shape index: {}]
  %s1 = inlined_call_operand.vmem [shape: f32[32,8], index: 1, kind: output, shape index: {}]
  // Predicated region
  $region2: #{tile.13} parent=0 // pred_check
    _
  $region3: #{tile.13} parent=0 // pred_check_branch
    %3 = sbr.rel (0) target = $region5
  $region4: #{tile.13} parent=0 // pred_region
    _
  $region5: #{tile.13} parent=0 // pred_fallthru
    _
  %v4 = vld [vmem:[%s0] ss:$0 sm:$0xff]
  %5 = vst [vmem:[%s1] sm:$0xff] %v4
  %s6 = scalar_lea.vmem %s1, 8
  %7 = vst [vmem:[%s6] sm:$0xff] %v4
  %s8 = scalar_lea.vmem %s1, 16
  %9 = vst [vmem:[%s8] sm:$0xff] %v4
  %s10 = scalar_lea.vmem %s1, 24
  %11 = vst [vmem:[%s10] sm:$0xff] %v4

// kernel: tile.14
$region0: #{tile.14}
  %s0 = inlined_call_operand.vmem [shape: f32[32,8], index: 0, kind: input, shape index: {}]
  %s1 = inlined_call_operand.vmem [shape: f32[1,256], index: 1, kind: output, shape index: {}]
  $region1: #{tile.14} parent=0
    #allocation0 [shape = 'u8[8192]{0}', space=vmem, size = 0x2000, scoped, tag = 'scoped mem for output reshape']
    %s2 = smov 3
    %v3 = vld [vmem:[%s0] ss:$16 sm:%s2]
    %vm4 = vcmask 64512
    %5 = vst.msk [vmem:[#allocation0] ss:$8 sm:$0x3] %vm4, %v3
    %s6 = scalar_lea.vmem %s0, 15
    %s7 = smov 3
    %v8 = vld [vmem:[%s6] ss:$16 sm:%s7]
    %9 = vrot.lane.b32.xlu0 %v8, 120
    %v10 = vpop.permute.xlu0 %9
    %vm11 = vcmask 1048512
    %12 = vst.msk [vmem:[#allocation0] ss:$8 sm:$0x3] %vm11, %v10
    %s13 = scalar_lea.vmem %s0, 14
    %s14 = smov 3
    %v15 = vld [vmem:[%s13] ss:$16 sm:%s14]
    %16 = vrot.lane.b32.xlu0 %v15, 112
    %v17 = vpop.permute.xlu0 %16
    %vm18 = vcmask 982912
    %19 = vst.msk [vmem:[#allocation0] ss:$8 sm:$0x3] %vm18, %v17
    %s20 = scalar_lea.vmem %s0, 13
    %s21 = smov 3
    %v22 = vld [vmem:[%s20] ss:$16 sm:%s21]
    %23 = vrot.lane.b32.xlu0 %v22, 104
    %v24 = vpop.permute.xlu0 %23
    %vm25 = vcmask 917312
    %26 = vst.msk [vmem:[#allocation0] ss:$8 sm:$0x3] %vm25, %v24
    %s27 = scalar_lea.vmem %s0, 12
    %s28 = smov 3
    %v29 = vld [vmem:[%s27] ss:$16 sm:%s28]
    %30 = vrot.lane.b32.xlu0 %v29, 96
    %v31 = vpop.permute.xlu0 %30
    %vm32 = vcmask 851712
    %33 = vst.msk [vmem:[#allocation0] ss:$8 sm:$0x3] %vm32, %v31
    %s34 = scalar_lea.vmem %s0, 11
    %s35 = smov 3
    %v36 = vld [vmem:[%s34] ss:$16 sm:%s35]
    %37 = vrot.lane.b32.xlu0 %v36, 88
    %v38 = vpop.permute.xlu0 %37
    %vm39 = vcmask 786112
    %40 = vst.msk [vmem:[#allocation0] ss:$8 sm:$0x3] %vm39, %v38
    %s41 = scalar_lea.vmem %s0, 10
    %s42 = smov 3
    %v43 = vld [vmem:[%s41] ss:$16 sm:%s42]
    %44 = vrot.lane.b32.xlu0 %v43, 80
    %v45 = vpop.permute.xlu0 %44
    %vm46 = vcmask 720512
    %47 = vst.msk [vmem:[#allocation0] ss:$8 sm:$0x3] %vm46, %v45
    %s48 = scalar_lea.vmem %s0, 9
    %s49 = smov 3
    %v50 = vld [vmem:[%s48] ss:$16 sm:%s49]
    %51 = vrot.lane.b32.xlu0 %v50, 72
    %v52 = vpop.permute.xlu0 %51
    %vm53 = vcmask 654912
    %54 = vst.msk [vmem:[#allocation0] ss:$8 sm:$0x3] %vm53, %v52
    %s55 = scalar_lea.vmem %s0, 8
    %s56 = smov 3
    %v57 = vld [vmem:[%s55] ss:$16 sm:%s56]
    %58 = vrot.lane.b32.xlu0 %v57, 64
    %v59 = vpop.permute.xlu0 %58
    %vm60 = vcmask 589312
    %61 = vst.msk [vmem:[#allocation0] ss:$8 sm:$0x3] %vm60, %v59
    %s62 = scalar_lea.vmem %s0, 7
    %s63 = smov 3
    %v64 = vld [vmem:[%s62] ss:$16 sm:%s63]
    %65 = vrot.lane.b32.xlu0 %v64, 56
    %v66 = vpop.permute.xlu0 %65
    %vm67 = vcmask 523712
    %68 = vst.msk [vmem:[#allocation0] ss:$8 sm:$0x3] %vm67, %v66
    %s69 = scalar_lea.vmem %s0, 6
    %s70 = smov 3
    %v71 = vld [vmem:[%s69] ss:$16 sm:%s70]
    %72 = vrot.lane.b32.xlu0 %v71, 48
    %v73 = vpop.permute.xlu0 %72
    %vm74 = vcmask 458112
    %75 = vst.msk [vmem:[#allocation0] ss:$8 sm:$0x3] %vm74, %v73
    %s76 = scalar_lea.vmem %s0, 5
    %s77 = smov 3
    %v78 = vld [vmem:[%s76] ss:$16 sm:%s77]
    %79 = vrot.lane.b32.xlu0 %v78, 40
    %v80 = vpop.permute.xlu0 %79
    %vm81 = vcmask 392512
    %82 = vst.msk [vmem:[#allocation0] ss:$8 sm:$0x3] %vm81, %v80
    %s83 = scalar_lea.vmem %s0, 4
    %s84 = smov 3
    %v85 = vld [vmem:[%s83] ss:$16 sm:%s84]
    %86 = vrot.lane.b32.xlu0 %v85, 32
    %v87 = vpop.permute.xlu0 %86
    %vm88 = vcmask 326912
    %89 = vst.msk [vmem:[#allocation0] ss:$8 sm:$0x3] %vm88, %v87
    %s90 = scalar_lea.vmem %s0, 3
    %s91 = smov 3
    %v92 = vld [vmem:[%s90] ss:$16 sm:%s91]
    %93 = vrot.lane.b32.xlu0 %v92, 24
    %v94 = vpop.permute.xlu0 %93
    %vm95 = vcmask 261312
    %96 = vst.msk [vmem:[#allocation0] ss:$8 sm:$0x3] %vm95, %v94
    %s97 = scalar_lea.vmem %s0, 2
    %s98 = smov 3
    %v99 = vld [vmem:[%s97] ss:$16 sm:%s98]
    %100 = vrot.lane.b32.xlu0 %v99, 16
    %v101 = vpop.permute.xlu0 %100
    %vm102 = vcmask 195712
    %103 = vst.msk [vmem:[#allocation0] ss:$8 sm:$0x3] %vm102, %v101
    %s104 = scalar_lea.vmem %s0, 1
    %s105 = smov 3
    %v106 = vld [vmem:[%s104] ss:$16 sm:%s105]
    %107 = vrot.lane.b32.xlu0 %v106, 8
    %v108 = vpop.permute.xlu0 %107
    %vm109 = vcmask 130112
    %110 = vst.msk [vmem:[#allocation0] ss:$8 sm:$0x3] %vm109, %v108
    %s112 = sshllo.u32 0, 1
    %v114 = vld [vmem:[#allocation0] sm:%s112]
    %s115 = sshllo.u32 0, 1
    %116 = vst [vmem:[%s1] sm:%s115] %v114
    %s117 = scalar_lea.vmem [#allocation0], 8
    %v118 = vld [vmem:[%s117] sm:%s112]
    %s119 = sshllo.u32 0, 1
    %s120 = scalar_lea.vmem %s1, 1
    %121 = vst [vmem:[%s120] sm:%s119] %v118

// kernel: upconv_block.3
$region0: #{upconv_block.3}
  #allocation0 [shape = 'u32[]', space=smem, size = 0x4, offset = 0x4, fixed_abs, tag = 'smem constant byte address 0x4 - core index']
  #allocation1 [shape = 'u32[144,128]{1,0:T(1,128)}', space=vmem, size = 0x12000, scoped, tag = 'internal scratch']
  %s0 = inlined_call_operand.vmem [shape: f32[64,256], index: 0, kind: input, shape index: {}]
  %s1 = inlined_call_operand.vmem [shape: f32[1,256], index: 1, kind: input, shape index: {}]
  %s2 = inlined_call_operand.vmem [shape: f32[1,256], index: 2, kind: input, shape index: {}]
  %s3 = inlined_call_operand.vmem [shape: f32[64,256], index: 3, kind: output, shape index: {}]
  %s4 = sld [smem:[#allocation0]]
  $region45: #{upconv_block.3} parent=0
    _
  %s6 = ssub.s32 1, %s4
  %s7 = scalar_select 0, %s6, %s4
  loop: start=0, step=1, limit=4
  $region2: #{upconv_block.3} parent=0 // loop_pre_header
    _
  $region3: #{upconv_block.3} parent=0 // loop_header
    %s9 = sphi 0, %s13
    %p10 = scmp.ge.s32.totalorder %s9, 4
    %s19 = sphi 0, %s21
    %s22 = sphi 0, %s19
    %s23 = sphi 0, %s22
    %s39 = sphi 0, %s23
    %s43 = sphi 0, %s43
    %s45 = sphi 0, %s43
    %s46 = sphi 0, %s45
    %s60 = sphi 0, %s46
    %s64 = sphi 0, %s64
    %s66 = sphi 0, %s64
    %s67 = sphi 0, %s66
    %s81 = sphi 0, %s67
    %s87 = sphi 0, %s89
    %s90 = sphi 0, %s87
    %s91 = sphi 0, %s90
    %s107 = sphi 0, %s91
  $region4: #{upconv_block.3} parent=0 // loop_header_branch
    %12 = sbr.rel (%p10) target = $region8
  $region5: #{upconv_block.3} parent=0 // loop_body
    %s14 = ssub.s32 %s9, 1
    %s15 = ssub.s32 %s9, 2
    %s16 = sadd.s32 %s9, 1
    %s17 = ssub.s32 %s9, %s16
    %p18 = scmp.eq.s32.totalorder %s17, 0
    %s20 = sadd.s32 %s19, 1
    %s21 = scalar_select %p18, %s19, %s20
    %p24 = pneg %p18
    %p25 = scmp.eq.s32.totalorder %s9, 1
    %p26 = por %p24, %p25
    %p27 = scmp.ne.s32.totalorder %s19, %s22
    %p28 = scmp.eq.s32.totalorder %s9, 0
    %p29 = por %p27, %p28
    %p30 = scmp.ne.s32.totalorder %s19, %s22
    %p31 = scmp.eq.s32.totalorder %s14, 1
    %p32 = por %p30, %p31
    %p33 = scmp.ne.s32.totalorder %s22, %s23
    %p34 = scmp.eq.s32.totalorder %s14, 0
    %p35 = por %p33, %p34
    %p36 = scmp.ne.s32.totalorder %s22, %s23
    %p37 = scmp.eq.s32.totalorder %s15, 1
    %p38 = por %p36, %p37
    %p40 = scmp.ne.s32.totalorder %s23, %s39
    %p41 = scmp.eq.s32.totalorder %s15, 0
    %p42 = por %p40, %p41
    %s44 = sadd.s32 %s43, 1
    %p47 = scmp.eq.s32.totalorder %s9, 1
    %p48 = scmp.ne.s32.totalorder %s43, %s45
    %p49 = scmp.eq.s32.totalorder %s9, 0
    %p50 = por %p48, %p49
    %p51 = scmp.ne.s32.totalorder %s43, %s45
    %p52 = scmp.eq.s32.totalorder %s14, 1
    %p53 = por %p51, %p52
    %p54 = scmp.ne.s32.totalorder %s45, %s46
    %p55 = scmp.eq.s32.totalorder %s14, 0
    %p56 = por %p54, %p55
    %p57 = scmp.ne.s32.totalorder %s45, %s46
    %p58 = scmp.eq.s32.totalorder %s15, 1
    %p59 = por %p57, %p58
    %p61 = scmp.ne.s32.totalorder %s46, %s60
    %p62 = scmp.eq.s32.totalorder %s15, 0
    %p63 = por %p61, %p62
    %s65 = sadd.s32 %s64, 1
    %p68 = scmp.eq.s32.totalorder %s9, 1
    %p69 = scmp.ne.s32.totalorder %s64, %s66
    %p70 = scmp.eq.s32.totalorder %s9, 0
    %p71 = por %p69, %p70
    %p72 = scmp.ne.s32.totalorder %s64, %s66
    %p73 = scmp.eq.s32.totalorder %s14, 1
    %p74 = por %p72, %p73
    %p75 = scmp.ne.s32.totalorder %s66, %s67
    %p76 = scmp.eq.s32.totalorder %s14, 0
    %p77 = por %p75, %p76
    %p78 = scmp.ne.s32.totalorder %s66, %s67
    %p79 = scmp.eq.s32.totalorder %s15, 1
    %p80 = por %p78, %p79
    %p82 = scmp.ne.s32.totalorder %s67, %s81
    %p83 = scmp.eq.s32.totalorder %s15, 0
    %p84 = por %p82, %p83
    %s85 = ssub.s32 %s9, %s16
    %p86 = scmp.eq.s32.totalorder %s85, 0
    %s88 = sadd.s32 %s87, 1
    %s89 = scalar_select %p86, %s87, %s88
    %p92 = pneg %p86
    %p93 = scmp.eq.s32.totalorder %s9, 1
    %p94 = por %p92, %p93
    %p95 = scmp.ne.s32.totalorder %s87, %s90
    %p96 = scmp.eq.s32.totalorder %s9, 0
    %p97 = por %p95, %p96
    %p98 = scmp.ne.s32.totalorder %s87, %s90
    %p99 = scmp.eq.s32.totalorder %s14, 1
    %p100 = por %p98, %p99
    %p101 = scmp.ne.s32.totalorder %s90, %s91
    %p102 = scmp.eq.s32.totalorder %s14, 0
    %p103 = por %p101, %p102
    %p104 = scmp.ne.s32.totalorder %s90, %s91
    %p105 = scmp.eq.s32.totalorder %s15, 1
    %p106 = por %p104, %p105
    %p108 = scmp.ne.s32.totalorder %s91, %s107
    %p109 = scmp.eq.s32.totalorder %s15, 0
    %p110 = por %p108, %p109
    %p111 = scmp.le.s32.totalorder 1, %s9
    %p112 = scmp.lt.s32.totalorder %s9, 3
    %p113 = pnand %p111, %p112
    %p114 = pneg %p113
    // Predicated region
    $region9: #{upconv_block.3} parent=5 // pred_check
      _
    $region10: #{upconv_block.3} parent=5 // pred_check_branch
      %116 = sbr.rel (%p113) target = $region12
    $region11: #{upconv_block.3} parent=5 // pred_region
      %s117 = ssub.s32 %s9, 1
      // Predicated region
      $region13: #{upconv_block.3} parent=11 // pred_check
        %p118 = pneg %p56
      $region14: #{upconv_block.3} parent=11 // pred_check_branch
        %120 = sbr.rel (%p118) target = $region16
      $region15: #{upconv_block.3} parent=11 // pred_region
        _
      $region16: #{upconv_block.3} parent=11 // pred_fallthru
        _
      // Predicated region
      $region17: #{upconv_block.3} parent=11 // pred_check
        %p121 = pneg %p77
      $region18: #{upconv_block.3} parent=11 // pred_check_branch
        %123 = sbr.rel (%p121) target = $region20
      $region19: #{upconv_block.3} parent=11 // pred_region
        _
      $region20: #{upconv_block.3} parent=11 // pred_fallthru
        _
    $region12: #{upconv_block.3} parent=5 // pred_fallthru
      _
    %p124 = scmp.lt.s32.totalorder %s9, 2
    // Predicated region
    $region21: #{upconv_block.3} parent=5 // pred_check
      %p125 = pneg %p124
    $region22: #{upconv_block.3} parent=5 // pred_check_branch
      %127 = sbr.rel (%p125) target = $region24
    $region23: #{upconv_block.3} parent=5 // pred_region
      // Predicated region
      $region25: #{upconv_block.3} parent=23 // pred_check
        %p128 = pneg %p29
      $region26: #{upconv_block.3} parent=23 // pred_check_branch
        %130 = sbr.rel (%p128) target = $region28
      $region27: #{upconv_block.3} parent=23 // pred_region
        %s131 = smul.u32 4, %s9
        %p132 = scmp.lt.s32.totalorder %s131, 7
        %s133 = scalar_select %p132, %s131, 7
        %s134 = smul.addr %s133, 2
        %s135 = smul.addr %s134, 8
        %s136 = scalar_lea.vmem %s0, %s135
        %s137 = smul.u32 4, %s9
      $region28: #{upconv_block.3} parent=23 // pred_fallthru
        _
    $region24: #{upconv_block.3} parent=5 // pred_fallthru
      _
    %p138 = scmp.le.s32.totalorder 1, %s9
    %p139 = scmp.lt.s32.totalorder %s9, 3
    %p140 = pnand %p138, %p139
    %p141 = pneg %p140
    // Predicated region
    $region29: #{upconv_block.3} parent=5 // pred_check
      _
    $region30: #{upconv_block.3} parent=5 // pred_check_branch
      %143 = sbr.rel (%p140) target = $region32
    $region31: #{upconv_block.3} parent=5 // pred_region
      %s144 = ssub.s32 %s9, 1
      %s145 = smul.u32 4, %s14
      %p146 = scmp.lt.s32.totalorder %s145, 7
      %s147 = scalar_select %p146, %s145, 7
      %s148 = smul.addr %s147, 2
      %s149 = smul.addr %s148, 8
      %s150 = scalar_lea.vmem %s0, %s149
      %p151 = pneg %p35
      %p152 = pneg %p32
      %p153 = pneg %p56
      %p154 = pneg %p53
      %p155 = pneg %p77
      %p156 = pneg %p74
      %p157 = pneg %p103
      %p158 = pneg %p100
      %s159 = smul.u32 4, %s14
      %p160 = scmp.lt.s32.totalorder %s159, 7
      %s161 = scalar_select %p160, %s159, 7
      %s162 = smul.addr %s161, 2
      %s163 = smul.addr %s162, 8
      %s164 = scalar_lea.vmem %s3, %s163
      %s165 = smul.u32 4, %s14
      %p166 = scmp.lt.s32.totalorder %s165, 7
      %s167 = scalar_select %p166, %s165, 7
      %s168 = smul.addr %s167, 2
      %s169 = smul.addr %s168, 8
      %s170 = scalar_lea.vmem %s0, %s169
      %s171 = smul.u32 4, %s14
      %s172 = smul.u32 4, %s14
      %p173 = scmp.lt.s32.totalorder %s172, 7
      %s174 = scalar_select %p173, %s172, 7
      %s175 = smul.addr %s174, 2
      %s176 = smul.addr %s175, 8
      %s177 = scalar_lea.vmem %s3, %s176
      %s178 = smul.u32 4, %s14
      %v179 = vld [vmem:[%s170] sm:$0xff]
      %v180 = vld [vmem:[%s170 + $0x8] sm:$0xff]
      %v181 = vld [vmem:[%s170 + $0x10] sm:$0xff]
      %v182 = vld [vmem:[%s170 + $0x18] sm:$0xff]
      %v183 = vld [vmem:[%s170 + $0x20] sm:$0xff]
      %v184 = vld [vmem:[%s170 + $0x28] sm:$0xff]
      %v185 = vld [vmem:[%s170 + $0x30] sm:$0xff]
      %v186 = vld [vmem:[%s170 + $0x38] sm:$0xff]
      %v187 = vld [vmem:[%s1] sm:$0x3]
      %v189 = vlaneseq
      %v190 = vshrl.u32 %v189, 7
      %v191 = vsub.s32 0, %v190
      %v192 = vrot.slane %v187, %v191
      %v193 = vlaneseq
      %v194 = vshrl.u32 %v193, 7
      %v195 = vsub.s32 1, %v194
      %v196 = vrot.slane %v187, %v195
      %v199 = vmul.f32 %v179, %v192
      %v200 = vmul.f32 %v180, %v196
      %v201 = vmul.f32 %v181, %v192
      %v202 = vmul.f32 %v182, %v196
      %v203 = vmul.f32 %v183, %v192
      %v204 = vmul.f32 %v184, %v196
      %v205 = vmul.f32 %v185, %v192
      %v206 = vmul.f32 %v186, %v196
      %v207 = vld [vmem:[%s2] sm:$0x3]
      %v209 = vlaneseq
      %v210 = vshrl.u32 %v209, 7
      %v211 = vsub.s32 0, %v210
      %v212 = vrot.slane %v207, %v211
      %v213 = vlaneseq
      %v214 = vshrl.u32 %v213, 7
      %v215 = vsub.s32 1, %v214
      %v216 = vrot.slane %v207, %v215
      %v219 = vadd.f32 %v199, %v212
      %v220 = vadd.f32 %v200, %v216
      %v221 = vadd.f32 %v201, %v212
      %v222 = vadd.f32 %v202, %v216
      %v223 = vadd.f32 %v203, %v212
      %v224 = vadd.f32 %v204, %v216
      %v225 = vadd.f32 %v205, %v212
      %v226 = vadd.f32 %v206, %v216
      %v227 = vmax.f32 %v219, 0.0
      %v228 = vmax.f32 %v220, 0.0
      %v229 = vmax.f32 %v221, 0.0
      %v230 = vmax.f32 %v222, 0.0
      %v231 = vmax.f32 %v223, 0.0
      %v232 = vmax.f32 %v224, 0.0
      %v233 = vmax.f32 %v225, 0.0
      %v234 = vmax.f32 %v226, 0.0
      %235 = vst [vmem:[%s177] sm:$0xff] %v227
      %236 = vst [vmem:[%s177 + $0x8] sm:$0xff] %v228
      %237 = vst [vmem:[%s177 + $0x10] sm:$0xff] %v229
      %238 = vst [vmem:[%s177 + $0x18] sm:$0xff] %v230
      %239 = vst [vmem:[%s177 + $0x20] sm:$0xff] %v231
      %240 = vst [vmem:[%s177 + $0x28] sm:$0xff] %v232
      %241 = vst [vmem:[%s177 + $0x30] sm:$0xff] %v233
      %242 = vst [vmem:[%s177 + $0x38] sm:$0xff] %v234
      %s243 = smul.u32 4, %s14
      %p244 = scmp.lt.s32.totalorder %s243, 7
      %s245 = scalar_select %p244, %s243, 7
      %s246 = smul.addr %s245, 2
      %s247 = smul.addr %s246, 8
      %s248 = scalar_lea.vmem %s3, %s247
      // Predicated region
      $region33: #{upconv_block.3} parent=31 // pred_check
        %p249 = pneg %p100
      $region34: #{upconv_block.3} parent=31 // pred_check_branch
        %251 = sbr.rel (%p249) target = $region36
      $region35: #{upconv_block.3} parent=31 // pred_region
        %s252 = smul.u32 4, %s14
      $region36: #{upconv_block.3} parent=31 // pred_fallthru
        _
    $region32: #{upconv_block.3} parent=5 // pred_fallthru
      _
    %p253 = scmp.le.s32.totalorder 2, %s9
    // Predicated region
    $region37: #{upconv_block.3} parent=5 // pred_check
      %p254 = pneg %p253
    $region38: #{upconv_block.3} parent=5 // pred_check_branch
      %256 = sbr.rel (%p254) target = $region40
    $region39: #{upconv_block.3} parent=5 // pred_region
      %s257 = ssub.s32 %s9, 2
      // Predicated region
      $region41: #{upconv_block.3} parent=39 // pred_check
        %p258 = pneg %p106
      $region42: #{upconv_block.3} parent=39 // pred_check_branch
        %260 = sbr.rel (%p258) target = $region44
      $region43: #{upconv_block.3} parent=39 // pred_region
        %s261 = smul.u32 4, %s15
        %p262 = scmp.lt.s32.totalorder %s261, 7
        %s263 = scalar_select %p262, %s261, 7
        %s264 = smul.addr %s263, 2
        %s265 = smul.addr %s264, 8
        %s266 = scalar_lea.vmem %s3, %s265
      $region44: #{upconv_block.3} parent=39 // pred_fallthru
        _
    $region40: #{upconv_block.3} parent=5 // pred_fallthru
      _
  $region6: #{upconv_block.3} parent=0 // loop_footer
    %s13 = sadd.s32 1, %s9
  $region7: #{upconv_block.3} parent=0 // loop_footer_branch
    %8 = sbr.rel target = $region3
  $region8: #{upconv_block.3} parent=0 // loop_exit
    _

// kernel: upconv_block.2
$region0: #{upconv_block.2}
  #allocation0 [shape = 'u32[]', space=smem, size = 0x4, offset = 0x4, fixed_abs, tag = 'smem constant byte address 0x4 - core index']
  #allocation1 [shape = 'u32[144,128]{1,0:T(1,128)}', space=vmem, size = 0x12000, scoped, tag = 'internal scratch']
  #allocation2 [shape = 'bf16[48,256]{1,0:T(16,128)(2,1)}', space=vmem, size = 0x6000, scoped, tag = 'scratch operand']
  %s0 = inlined_call_operand.vmem [shape: bf16[32,64], index: 0, kind: input, shape index: {}]
  %s1 = inlined_call_operand.vmem [shape: bf16[32,48], index: 1, kind: input, shape index: {}]
  %s2 = inlined_call_operand.vmem [shape: bf16[3,64,256], index: 2, kind: input, shape index: {}]
  %s3 = inlined_call_operand.vmem [shape: f32[256,8], index: 3, kind: input, shape index: {}]
  %s4 = inlined_call_operand.vmem [shape: f32[8,256], index: 4, kind: input, shape index: {}]
  %s5 = inlined_call_operand.vmem [shape: f32[64,256], index: 5, kind: output, shape index: {0}]
  %s6 = inlined_call_operand.vmem [shape: f32[2,2,8], index: 6, kind: output, shape index: {1}]
  %7 = xla_tuple %s5, %s6
  %s8 = sld [smem:[#allocation0]]
  $region61: #{upconv_block.2} parent=0
    _
  %s10 = ssub.s32 1, %s8
  %s11 = scalar_select 0, %s10, %s8
  loop: start=0, step=1, limit=4
  $region2: #{upconv_block.2} parent=0 // loop_pre_header
    _
  $region3: #{upconv_block.2} parent=0 // loop_header
    %s13 = sphi 0, %s17
    %p14 = scmp.ge.s32.totalorder %s13, 4
    %s23 = sphi 0, %s25
    %s26 = sphi 0, %s23
    %s27 = sphi 0, %s26
    %s43 = sphi 0, %s27
    %s47 = sphi 0, %s47
    %s49 = sphi 0, %s47
    %s50 = sphi 0, %s49
    %s64 = sphi 0, %s50
    %s68 = sphi 0, %s68
    %s70 = sphi 0, %s68
    %s71 = sphi 0, %s70
    %s85 = sphi 0, %s71
    %s89 = sphi 0, %s89
    %s91 = sphi 0, %s89
    %s92 = sphi 0, %s91
    %s106 = sphi 0, %s92
    %s110 = sphi 0, %s110
    %s112 = sphi 0, %s110
    %s113 = sphi 0, %s112
    %s127 = sphi 0, %s113
    %s133 = sphi 0, %s135
    %s136 = sphi 0, %s133
    %s137 = sphi 0, %s136
    %s153 = sphi 0, %s137
    %s159 = sphi 0, %s161
    %s162 = sphi 0, %s159
    %s163 = sphi 0, %s162
    %s179 = sphi 0, %s163
  $region4: #{upconv_block.2} parent=0 // loop_header_branch
    %16 = sbr.rel (%p14) target = $region8
  $region5: #{upconv_block.2} parent=0 // loop_body
    %s18 = ssub.s32 %s13, 1
    %s19 = ssub.s32 %s13, 2
    %s20 = sadd.s32 %s13, 1
    %s21 = ssub.s32 %s13, %s20
    %p22 = scmp.eq.s32.totalorder %s21, 0
    %s24 = sadd.s32 %s23, 1
    %s25 = scalar_select %p22, %s23, %s24
    %p28 = pneg %p22
    %p29 = scmp.eq.s32.totalorder %s13, 1
    %p30 = por %p28, %p29
    %p31 = scmp.ne.s32.totalorder %s23, %s26
    %p32 = scmp.eq.s32.totalorder %s13, 0
    %p33 = por %p31, %p32
    %p34 = scmp.ne.s32.totalorder %s23, %s26
    %p35 = scmp.eq.s32.totalorder %s18, 1
    %p36 = por %p34, %p35
    %p37 = scmp.ne.s32.totalorder %s26, %s27
    %p38 = scmp.eq.s32.totalorder %s18, 0
    %p39 = por %p37, %p38
    %p40 = scmp.ne.s32.totalorder %s26, %s27
    %p41 = scmp.eq.s32.totalorder %s19, 1
    %p42 = por %p40, %p41
    %p44 = scmp.ne.s32.totalorder %s27, %s43
    %p45 = scmp.eq.s32.totalorder %s19, 0
    %p46 = por %p44, %p45
    %s48 = sadd.s32 %s47, 1
    %p51 = scmp.eq.s32.totalorder %s13, 1
    %p52 = scmp.ne.s32.totalorder %s47, %s49
    %p53 = scmp.eq.s32.totalorder %s13, 0
    %p54 = por %p52, %p53
    %p55 = scmp.ne.s32.totalorder %s47, %s49
    %p56 = scmp.eq.s32.totalorder %s18, 1
    %p57 = por %p55, %p56
    %p58 = scmp.ne.s32.totalorder %s49, %s50
    %p59 = scmp.eq.s32.totalorder %s18, 0
    %p60 = por %p58, %p59
    %p61 = scmp.ne.s32.totalorder %s49, %s50
    %p62 = scmp.eq.s32.totalorder %s19, 1
    %p63 = por %p61, %p62
    %p65 = scmp.ne.s32.totalorder %s50, %s64
    %p66 = scmp.eq.s32.totalorder %s19, 0
    %p67 = por %p65, %p66
    %s69 = sadd.s32 %s68, 1
    %p72 = scmp.eq.s32.totalorder %s13, 1
    %p73 = scmp.ne.s32.totalorder %s68, %s70
    %p74 = scmp.eq.s32.totalorder %s13, 0
    %p75 = por %p73, %p74
    %p76 = scmp.ne.s32.totalorder %s68, %s70
    %p77 = scmp.eq.s32.totalorder %s18, 1
    %p78 = por %p76, %p77
    %p79 = scmp.ne.s32.totalorder %s70, %s71
    %p80 = scmp.eq.s32.totalorder %s18, 0
    %p81 = por %p79, %p80
    %p82 = scmp.ne.s32.totalorder %s70, %s71
    %p83 = scmp.eq.s32.totalorder %s19, 1
    %p84 = por %p82, %p83
    %p86 = scmp.ne.s32.totalorder %s71, %s85
    %p87 = scmp.eq.s32.totalorder %s19, 0
    %p88 = por %p86, %p87
    %s90 = sadd.s32 %s89, 1
    %p93 = scmp.eq.s32.totalorder %s13, 1
    %p94 = scmp.ne.s32.totalorder %s89, %s91
    %p95 = scmp.eq.s32.totalorder %s13, 0
    %p96 = por %p94, %p95
    %p97 = scmp.ne.s32.totalorder %s89, %s91
    %p98 = scmp.eq.s32.totalorder %s18, 1
    %p99 = por %p97, %p98
    %p100 = scmp.ne.s32.totalorder %s91, %s92
    %p101 = scmp.eq.s32.totalorder %s18, 0
    %p102 = por %p100, %p101
    %p103 = scmp.ne.s32.totalorder %s91, %s92
    %p104 = scmp.eq.s32.totalorder %s19, 1
    %p105 = por %p103, %p104
    %p107 = scmp.ne.s32.totalorder %s92, %s106
    %p108 = scmp.eq.s32.totalorder %s19, 0
    %p109 = por %p107, %p108
    %s111 = sadd.s32 %s110, 1
    %p114 = scmp.eq.s32.totalorder %s13, 1
    %p115 = scmp.ne.s32.totalorder %s110, %s112
    %p116 = scmp.eq.s32.totalorder %s13, 0
    %p117 = por %p115, %p116
    %p118 = scmp.ne.s32.totalorder %s110, %s112
    %p119 = scmp.eq.s32.totalorder %s18, 1
    %p120 = por %p118, %p119
    %p121 = scmp.ne.s32.totalorder %s112, %s113
    %p122 = scmp.eq.s32.totalorder %s18, 0
    %p123 = por %p121, %p122
    %p124 = scmp.ne.s32.totalorder %s112, %s113
    %p125 = scmp.eq.s32.totalorder %s19, 1
    %p126 = por %p124, %p125
    %p128 = scmp.ne.s32.totalorder %s113, %s127
    %p129 = scmp.eq.s32.totalorder %s19, 0
    %p130 = por %p128, %p129
    %s131 = ssub.s32 %s13, %s20
    %p132 = scmp.eq.s32.totalorder %s131, 0
    %s134 = sadd.s32 %s133, 1
    %s135 = scalar_select %p132, %s133, %s134
    %p138 = pneg %p132
    %p139 = scmp.eq.s32.totalorder %s13, 1
    %p140 = por %p138, %p139
    %p141 = scmp.ne.s32.totalorder %s133, %s136
    %p142 = scmp.eq.s32.totalorder %s13, 0
    %p143 = por %p141, %p142
    %p144 = scmp.ne.s32.totalorder %s133, %s136
    %p145 = scmp.eq.s32.totalorder %s18, 1
    %p146 = por %p144, %p145
    %p147 = scmp.ne.s32.totalorder %s136, %s137
    %p148 = scmp.eq.s32.totalorder %s18, 0
    %p149 = por %p147, %p148
    %p150 = scmp.ne.s32.totalorder %s136, %s137
    %p151 = scmp.eq.s32.totalorder %s19, 1
    %p152 = por %p150, %p151
    %p154 = scmp.ne.s32.totalorder %s137, %s153
    %p155 = scmp.eq.s32.totalorder %s19, 0
    %p156 = por %p154, %p155
    %s157 = ssub.s32 %s13, %s20
    %p158 = scmp.eq.s32.totalorder %s157, 0
    %s160 = sadd.s32 %s159, 1
    %s161 = scalar_select %p158, %s159, %s160
    %p164 = pneg %p158
    %p165 = scmp.eq.s32.totalorder %s13, 1
    %p166 = por %p164, %p165
    %p167 = scmp.ne.s32.totalorder %s159, %s162
    %p168 = scmp.eq.s32.totalorder %s13, 0
    %p169 = por %p167, %p168
    %p170 = scmp.ne.s32.totalorder %s159, %s162
    %p171 = scmp.eq.s32.totalorder %s18, 1
    %p172 = por %p170, %p171
    %p173 = scmp.ne.s32.totalorder %s162, %s163
    %p174 = scmp.eq.s32.totalorder %s18, 0
    %p175 = por %p173, %p174
    %p176 = scmp.ne.s32.totalorder %s162, %s163
    %p177 = scmp.eq.s32.totalorder %s19, 1
    %p178 = por %p176, %p177
    %p180 = scmp.ne.s32.totalorder %s163, %s179
    %p181 = scmp.eq.s32.totalorder %s19, 0
    %p182 = por %p180, %p181
    %p183 = scmp.le.s32.totalorder 1, %s13
    %p184 = scmp.lt.s32.totalorder %s13, 3
    %p185 = pnand %p183, %p184
    %p186 = pneg %p185
    // Predicated region
    $region9: #{upconv_block.2} parent=5 // pred_check
      _
    $region10: #{upconv_block.2} parent=5 // pred_check_branch
      %188 = sbr.rel (%p185) target = $region12
    $region11: #{upconv_block.2} parent=5 // pred_region
      %s189 = ssub.s32 %s13, 1
      // Predicated region
      $region13: #{upconv_block.2} parent=11 // pred_check
        %p190 = pneg %p60
      $region14: #{upconv_block.2} parent=11 // pred_check_branch
        %192 = sbr.rel (%p190) target = $region16
      $region15: #{upconv_block.2} parent=11 // pred_region
        _
      $region16: #{upconv_block.2} parent=11 // pred_fallthru
        _
      // Predicated region
      $region17: #{upconv_block.2} parent=11 // pred_check
        %p193 = pneg %p81
      $region18: #{upconv_block.2} parent=11 // pred_check_branch
        %195 = sbr.rel (%p193) target = $region20
      $region19: #{upconv_block.2} parent=11 // pred_region
        _
      $region20: #{upconv_block.2} parent=11 // pred_fallthru
        _
      // Predicated region
      $region21: #{upconv_block.2} parent=11 // pred_check
        %p196 = pneg %p102
      $region22: #{upconv_block.2} parent=11 // pred_check_branch
        %198 = sbr.rel (%p196) target = $region24
      $region23: #{upconv_block.2} parent=11 // pred_region
        _
      $region24: #{upconv_block.2} parent=11 // pred_fallthru
        _
      // Predicated region
      $region25: #{upconv_block.2} parent=11 // pred_check
        %p199 = pneg %p123
      $region26: #{upconv_block.2} parent=11 // pred_check_branch
        %201 = sbr.rel (%p199) target = $region28
      $region27: #{upconv_block.2} parent=11 // pred_region
        _
      $region28: #{upconv_block.2} parent=11 // pred_fallthru
        _
    $region12: #{upconv_block.2} parent=5 // pred_fallthru
      _
    %p202 = scmp.lt.s32.totalorder %s13, 2
    // Predicated region
    $region29: #{upconv_block.2} parent=5 // pred_check
      %p203 = pneg %p202
    $region30: #{upconv_block.2} parent=5 // pred_check_branch
      %205 = sbr.rel (%p203) target = $region32
    $region31: #{upconv_block.2} parent=5 // pred_region
      // Predicated region
      $region33: #{upconv_block.2} parent=31 // pred_check
        %p206 = pneg %p33
      $region34: #{upconv_block.2} parent=31 // pred_check_branch
        %208 = sbr.rel (%p206) target = $region36
      $region35: #{upconv_block.2} parent=31 // pred_region
        %s209 = smul.u32 2, %s13
        %p210 = scmp.lt.s32.totalorder %s209, 3
        %s211 = scalar_select %p210, %s209, 3
        %s212 = smul.addr %s211, 4
        %s213 = scalar_lea.vmem %s0, %s212
        %s214 = smul.u32 2, %s13
      $region36: #{upconv_block.2} parent=31 // pred_fallthru
        _
    $region32: #{upconv_block.2} parent=5 // pred_fallthru
      _
    %p215 = scmp.le.s32.totalorder 1, %s13
    %p216 = scmp.lt.s32.totalorder %s13, 3
    %p217 = pnand %p215, %p216
    %p218 = pneg %p217
    // Predicated region
    $region37: #{upconv_block.2} parent=5 // pred_check
      _
    $region38: #{upconv_block.2} parent=5 // pred_check_branch
      %220 = sbr.rel (%p217) target = $region40
    $region39: #{upconv_block.2} parent=5 // pred_region
      %s221 = ssub.s32 %s13, 1
      %s222 = smul.u32 2, %s18
      %p223 = scmp.lt.s32.totalorder %s222, 3
      %s224 = scalar_select %p223, %s222, 3
      %s225 = smul.addr %s224, 4
      %s226 = scalar_lea.vmem %s0, %s225
      %p227 = pneg %p39
      %p228 = pneg %p36
      %p229 = pneg %p60
      %p230 = pneg %p57
      %p231 = pneg %p81
      %p232 = pneg %p78
      %p233 = pneg %p102
      %p234 = pneg %p99
      %p235 = pneg %p123
      %p236 = pneg %p120
      %p237 = pneg %p149
      %p238 = pneg %p146
      %s239 = smul.u32 4, %s18
      %p240 = scmp.lt.s32.totalorder %s239, 7
      %s241 = scalar_select %p240, %s239, 7
      %s242 = smul.addr %s241, 2
      %s243 = smul.addr %s242, 8
      %s244 = scalar_lea.vmem %s5, %s243
      %p245 = pneg %p175
      %p246 = pneg %p172
      %p247 = scmp.lt.s32.totalorder %s18, 1
      %s248 = scalar_select %p247, %s18, 1
      %s249 = smul.addr %s248, 2
      %s250 = scalar_lea.vmem %s6, %s249
      %s251 = smul.u32 2, %s18
      %p252 = scmp.lt.s32.totalorder %s251, 3
      %s253 = scalar_select %p252, %s251, 3
      %s254 = smul.addr %s253, 4
      %s255 = scalar_lea.vmem %s0, %s254
      %s256 = smul.u32 2, %s18
      %s257 = smul.u32 4, %s18
      %p258 = scmp.lt.s32.totalorder %s257, 7
      %s259 = scalar_select %p258, %s257, 7
      %s260 = smul.addr %s259, 2
      %s261 = smul.addr %s260, 8
      %s262 = scalar_lea.vmem %s5, %s261
      %s263 = smul.u32 4, %s18
      %p264 = scmp.lt.s32.totalorder %s18, 1
      %s265 = scalar_select %p264, %s18, 1
      %s266 = smul.addr %s265, 2
      %s267 = scalar_lea.vmem %s6, %s266
      %v269 = vld [vmem:[%s255] sm:$0xf]
      %v270 = vld [vmem:[%s255 + $0x4] sm:$0xf]
      %v271 = vld [vmem:[%s2] sm:$0xff]
      %v272 = vld [vmem:[%s2 + $0x8] sm:$0xff]
      %v273 = vld [vmem:[%s2 + $0x10] sm:$0xff]
      %v274 = vld [vmem:[%s2 + $0x18] sm:$0xff]
      %v275 = vld [vmem:[%s2 + $0x20] sm:$0xff]
      %v276 = vld [vmem:[%s2 + $0x28] sm:$0xff]
      %v277 = vld [vmem:[%s2 + $0x30] sm:$0xff]
      %v278 = vld [vmem:[%s2 + $0x38] sm:$0xff]
      %v281 = vunpack.c.l.b16 %v269
      %v282 = vunpack.c.l.b16 %v270
      %v283 = vpack.c.b16 %v282, %v281
      %v292 = vunpack.c.l.b16 %v271
      %v293 = vunpack.c.h.b16 %v271
      %v294 = vunpack.c.l.b16 %v272
      %v295 = vunpack.c.h.b16 %v272
      %v296 = vunpack.c.l.b16 %v273
      %v297 = vunpack.c.h.b16 %v273
      %v298 = vunpack.c.l.b16 %v274
      %v299 = vunpack.c.h.b16 %v274
      %v300 = vunpack.c.l.b16 %v275
      %v301 = vunpack.c.h.b16 %v275
      %v302 = vunpack.c.l.b16 %v276
      %v303 = vunpack.c.h.b16 %v276
      %v304 = vunpack.c.l.b16 %v277
      %v305 = vunpack.c.h.b16 %v277
      %v306 = vunpack.c.l.b16 %v278
      %v307 = vunpack.c.h.b16 %v278
      %v308 = vpack.c.b16 %v294, %v292
      %v309 = vpack.c.b16 %v295, %v293
      %v310 = vpack.c.b16 %v298, %v296
      %v311 = vpack.c.b16 %v299, %v297
      %v312 = vpack.c.b16 %v302, %v300
      %v313 = vpack.c.b16 %v303, %v301
      %v314 = vpack.c.b16 %v306, %v304
      %v315 = vpack.c.b16 %v307, %v305
      %vm324 = vcmask 523264
      %v326 = vsel %vm324, %v283, 0
      %328 = vmatprep.subr.bf16.mxu0 %v309
      %329 = vmatpush1.bf16.msra.mxu0 %v308
      %330 = vmatprep.subr.bf16.mxu0 %v311
      %331 = vmatpush1.bf16.msra.mxu0 %v310
      %332 = vmatprep.subr.bf16.mxu0 %v313
      %333 = vmatpush1.bf16.msra.mxu0 %v312
      %334 = vmatprep.subr.bf16.mxu0 %v315
      %335 = vmatpush1.bf16.msra.mxu0 %v314
      %336 = vmatprep.subr.bf16.mxu0 0
      %337 = vmatpush1.bf16.msra.mxu0 0
      %338 = vmatprep.subr.bf16.mxu0 0
      %339 = vmatpush1.bf16.msra.mxu0 0
      %340 = vmatprep.subr.bf16.mxu0 0
      %341 = vmatpush1.bf16.msra.mxu0 0
      %342 = vmatprep.subr.bf16.mxu0 0
      %343 = vmatpush1.bf16.msra.mxu0 0
      %344 = vmatprep.subr.bf16.mxu0 0
      %345 = vmatpush1.bf16.msra.mxu0 0
      %346 = vmatprep.subr.bf16.mxu0 0
      %347 = vmatpush1.bf16.msra.mxu0 0
      %348 = vmatprep.subr.bf16.mxu0 0
      %349 = vmatpush1.bf16.msra.mxu0 0
      %350 = vmatprep.subr.bf16.mxu0 0
      %351 = vmatpush1.bf16.msra.mxu0 0
      %352 = vmatprep.subr.bf16.mxu0 0
      %353 = vmatpush1.bf16.msra.mxu0 0
      %354 = vmatprep.subr.bf16.mxu0 0
      %355 = vmatpush1.bf16.msra.mxu0 0
      %356 = vmatprep.subr.bf16.mxu0 0
      %357 = vmatpush1.bf16.msra.mxu0 0
      %358 = vmatprep.subr.bf16.mxu0 0
      %359 = vmatpush1.bf16.msra.mxu0 0
      %360 = vmatprep.mubr.bf16.mxu0 0
      %361 = vmatmul.mubr.bf16.gmra.mrb[0].mxu0 %v326
      %v362 = vpop.f32.mrb[0].mxu0
      %v363 = vadd.f32 0.0, %v362
      %v364 = vpop.f32.mrb[0].mxu0
      %v365 = vadd.f32 0.0, %v364
      %v366 = vpop.f32.mrb[0].mxu0
      %v367 = vadd.f32 0.0, %v366
      %v368 = vpop.f32.mrb[0].mxu0
      %v369 = vadd.f32 0.0, %v368
      %370 = vdwg.mxu0
      %v371 = vpack.c.bf16 %v367, %v363
      %v372 = vpack.c.bf16 %v369, %v365
      %373 = vst [vmem:[#allocation2] sm:$0xff] %v371
      %374 = vst [vmem:[#allocation2 + $0x8] sm:$0xff] %v372
      %s375 = scalar_lea.vmem %s2, 64
      %v376 = vld [vmem:[%s375] sm:$0xff]
      %v377 = vld [vmem:[%s375 + $0x8] sm:$0xff]
      %v378 = vld [vmem:[%s375 + $0x10] sm:$0xff]
      %v379 = vld [vmem:[%s375 + $0x18] sm:$0xff]
      %v380 = vld [vmem:[%s375 + $0x20] sm:$0xff]
      %v381 = vld [vmem:[%s375 + $0x28] sm:$0xff]
      %v382 = vld [vmem:[%s375 + $0x30] sm:$0xff]
      %v383 = vld [vmem:[%s375 + $0x38] sm:$0xff]
      %v392 = vunpack.c.l.b16 %v376
      %v393 = vunpack.c.h.b16 %v376
      %v394 = vunpack.c.l.b16 %v377
      %v395 = vunpack.c.h.b16 %v377
      %v396 = vunpack.c.l.b16 %v378
      %v397 = vunpack.c.h.b16 %v378
      %v398 = vunpack.c.l.b16 %v379
      %v399 = vunpack.c.h.b16 %v379
      %v400 = vunpack.c.l.b16 %v380
      %v401 = vunpack.c.h.b16 %v380
      %v402 = vunpack.c.l.b16 %v381
      %v403 = vunpack.c.h.b16 %v381
      %v404 = vunpack.c.l.b16 %v382
      %v405 = vunpack.c.h.b16 %v382
      %v406 = vunpack.c.l.b16 %v383
      %v407 = vunpack.c.h.b16 %v383
      %v408 = vpack.c.b16 %v394, %v392
      %v409 = vpack.c.b16 %v395, %v393
      %v410 = vpack.c.b16 %v398, %v396
      %v411 = vpack.c.b16 %v399, %v397
      %v412 = vpack.c.b16 %v402, %v400
      %v413 = vpack.c.b16 %v403, %v401
      %v414 = vpack.c.b16 %v406, %v404
      %v415 = vpack.c.b16 %v407, %v405
      %424 = vmatprep.subr.bf16.mxu0 %v409
      %425 = vmatpush1.bf16.msra.mxu0 %v408
      %426 = vmatprep.subr.bf16.mxu0 %v411
      %427 = vmatpush1.bf16.msra.mxu0 %v410
      %428 = vmatprep.subr.bf16.mxu0 %v413
      %429 = vmatpush1.bf16.msra.mxu0 %v412
      %430 = vmatprep.subr.bf16.mxu0 %v415
      %431 = vmatpush1.bf16.msra.mxu0 %v414
      %432 = vmatprep.subr.bf16.mxu0 0
      %433 = vmatpush1.bf16.msra.mxu0 0
      %434 = vmatprep.subr.bf16.mxu0 0
      %435 = vmatpush1.bf16.msra.mxu0 0
      %436 = vmatprep.subr.bf16.mxu0 0
      %437 = vmatpush1.bf16.msra.mxu0 0
      %438 = vmatprep.subr.bf16.mxu0 0
      %439 = vmatpush1.bf16.msra.mxu0 0
      %440 = vmatprep.subr.bf16.mxu0 0
      %441 = vmatpush1.bf16.msra.mxu0 0
      %442 = vmatprep.subr.bf16.mxu0 0
      %443 = vmatpush1.bf16.msra.mxu0 0
      %444 = vmatprep.subr.bf16.mxu0 0
      %445 = vmatpush1.bf16.msra.mxu0 0
      %446 = vmatprep.subr.bf16.mxu0 0
      %447 = vmatpush1.bf16.msra.mxu0 0
      %448 = vmatprep.subr.bf16.mxu0 0
      %449 = vmatpush1.bf16.msra.mxu0 0
      %450 = vmatprep.subr.bf16.mxu0 0
      %451 = vmatpush1.bf16.msra.mxu0 0
      %452 = vmatprep.subr.bf16.mxu0 0
      %453 = vmatpush1.bf16.msra.mxu0 0
      %454 = vmatprep.subr.bf16.mxu0 0
      %455 = vmatpush1.bf16.msra.mxu0 0
      %456 = vmatprep.mubr.bf16.mxu0 0
      %457 = vmatmul.mubr.bf16.gmra.mrb[0].mxu0 %v326
      %v458 = vpop.f32.mrb[0].mxu0
      %v459 = vadd.f32 0.0, %v458
      %v460 = vpop.f32.mrb[0].mxu0
      %v461 = vadd.f32 0.0, %v460
      %v462 = vpop.f32.mrb[0].mxu0
      %v463 = vadd.f32 0.0, %v462
      %v464 = vpop.f32.mrb[0].mxu0
      %v465 = vadd.f32 0.0, %v464
      %466 = vdwg.mxu0
      %v467 = vpack.c.bf16 %v463, %v459
      %v468 = vpack.c.bf16 %v465, %v461
      %469 = vst [vmem:[#allocation2 + $0x10] sm:$0xff] %v467
      %470 = vst [vmem:[#allocation2 + $0x18] sm:$0xff] %v468
      %s471 = scalar_lea.vmem %s2, 128
      %v472 = vld [vmem:[%s471] sm:$0xff]
      %v473 = vld [vmem:[%s471 + $0x8] sm:$0xff]
      %v474 = vld [vmem:[%s471 + $0x10] sm:$0xff]
      %v475 = vld [vmem:[%s471 + $0x18] sm:$0xff]
      %v476 = vld [vmem:[%s471 + $0x20] sm:$0xff]
      %v477 = vld [vmem:[%s471 + $0x28] sm:$0xff]
      %v478 = vld [vmem:[%s471 + $0x30] sm:$0xff]
      %v479 = vld [vmem:[%s471 + $0x38] sm:$0xff]
      %v488 = vunpack.c.l.b16 %v472
      %v489 = vunpack.c.h.b16 %v472
      %v490 = vunpack.c.l.b16 %v473
      %v491 = vunpack.c.h.b16 %v473
      %v492 = vunpack.c.l.b16 %v474
      %v493 = vunpack.c.h.b16 %v474
      %v494 = vunpack.c.l.b16 %v475
      %v495 = vunpack.c.h.b16 %v475
      %v496 = vunpack.c.l.b16 %v476
      %v497 = vunpack.c.h.b16 %v476
      %v498 = vunpack.c.l.b16 %v477
      %v499 = vunpack.c.h.b16 %v477
      %v500 = vunpack.c.l.b16 %v478
      %v501 = vunpack.c.h.b16 %v478
      %v502 = vunpack.c.l.b16 %v479
      %v503 = vunpack.c.h.b16 %v479
      %v504 = vpack.c.b16 %v490, %v488
      %v505 = vpack.c.b16 %v491, %v489
      %v506 = vpack.c.b16 %v494, %v492
      %v507 = vpack.c.b16 %v495, %v493
      %v508 = vpack.c.b16 %v498, %v496
      %v509 = vpack.c.b16 %v499, %v497
      %v510 = vpack.c.b16 %v502, %v500
      %v511 = vpack.c.b16 %v503, %v501
      %520 = vmatprep.subr.bf16.mxu0 %v505
      %521 = vmatpush1.bf16.msra.mxu0 %v504
      %522 = vmatprep.subr.bf16.mxu0 %v507
      %523 = vmatpush1.bf16.msra.mxu0 %v506
      %524 = vmatprep.subr.bf16.mxu0 %v509
      %525 = vmatpush1.bf16.msra.mxu0 %v508
      %526 = vmatprep.subr.bf16.mxu0 %v511
      %527 = vmatpush1.bf16.msra.mxu0 %v510
      %528 = vmatprep.subr.bf16.mxu0 0
      %529 = vmatpush1.bf16.msra.mxu0 0
      %530 = vmatprep.subr.bf16.mxu0 0
      %531 = vmatpush1.bf16.msra.mxu0 0
      %532 = vmatprep.subr.bf16.mxu0 0
      %533 = vmatpush1.bf16.msra.mxu0 0
      %534 = vmatprep.subr.bf16.mxu0 0
      %535 = vmatpush1.bf16.msra.mxu0 0
      %536 = vmatprep.subr.bf16.mxu0 0
      %537 = vmatpush1.bf16.msra.mxu0 0
      %538 = vmatprep.subr.bf16.mxu0 0
      %539 = vmatpush1.bf16.msra.mxu0 0
      %540 = vmatprep.subr.bf16.mxu0 0
      %541 = vmatpush1.bf16.msra.mxu0 0
      %542 = vmatprep.subr.bf16.mxu0 0
      %543 = vmatpush1.bf16.msra.mxu0 0
      %544 = vmatprep.subr.bf16.mxu0 0
      %545 = vmatpush1.bf16.msra.mxu0 0
      %546 = vmatprep.subr.bf16.mxu0 0
      %547 = vmatpush1.bf16.msra.mxu0 0
      %548 = vmatprep.subr.bf16.mxu0 0
      %549 = vmatpush1.bf16.msra.mxu0 0
      %550 = vmatprep.subr.bf16.mxu0 0
      %551 = vmatpush1.bf16.msra.mxu0 0
      %552 = vmatprep.mubr.bf16.mxu0 0
      %553 = vmatmul.mubr.bf16.gmra.mrb[0].mxu0 %v326
      %v554 = vpop.f32.mrb[0].mxu0
      %v555 = vadd.f32 0.0, %v554
      %v556 = vpop.f32.mrb[0].mxu0
      %v557 = vadd.f32 0.0, %v556
      %v558 = vpop.f32.mrb[0].mxu0
      %v559 = vadd.f32 0.0, %v558
      %v560 = vpop.f32.mrb[0].mxu0
      %v561 = vadd.f32 0.0, %v560
      %562 = vdwg.mxu0
      %v563 = vpack.c.bf16 %v559, %v555
      %v564 = vpack.c.bf16 %v561, %v557
      %565 = vst [vmem:[#allocation2 + $0x20] sm:$0xff] %v563
      %566 = vst [vmem:[#allocation2 + $0x28] sm:$0xff] %v564
      %v567 = vld [vmem:[%s1] sm:$0xf]
      %v568 = vld [vmem:[%s1 + $0x4] sm:$0xf]
      %v569 = vld [vmem:[%s1 + $0x8] sm:$0xf]
      %v570 = vld [vmem:[%s1 + $0xc] sm:$0xf]
      %v571 = vld [vmem:[#allocation2] sm:$0xff]
      %v572 = vld [vmem:[#allocation2 + $0x8] sm:$0xff]
      %v573 = vld [vmem:[#allocation2 + $0x10] sm:$0xff]
      %v574 = vld [vmem:[#allocation2 + $0x18] sm:$0xff]
      %v575 = vld [vmem:[#allocation2 + $0x20] sm:$0xff]
      %v576 = vld [vmem:[#allocation2 + $0x28] sm:$0xff]
      %v581 = vunpack.c.l.b16 %v567
      %v582 = vunpack.c.l.b16 %v568
      %v583 = vunpack.c.l.b16 %v569
      %v584 = vunpack.c.l.b16 %v570
      %v585 = vpack.c.b16 %v582, %v581
      %v586 = vpack.c.b16 %v584, %v583
      %vm587 = vcmask 392192
      %v589 = vsel %vm587, %v585, 0
      %v592 = vsel %vm587, %v586, 0
      %594 = vmatprep.subr.bf16.mxu0 %v572
      %595 = vmatpush1.bf16.msra.mxu0 %v571
      %596 = vmatprep.subr.bf16.mxu0 %v574
      %597 = vmatpush1.bf16.msra.mxu0 %v573
      %598 = vmatprep.subr.bf16.mxu0 %v576
      %599 = vmatpush1.bf16.msra.mxu0 %v575
      %600 = vmatprep.subr.bf16.mxu0 0
      %601 = vmatpush1.bf16.msra.mxu0 0
      %602 = vmatprep.subr.bf16.mxu0 0
      %603 = vmatpush1.bf16.msra.mxu0 0
      %604 = vmatprep.subr.bf16.mxu0 0
      %605 = vmatpush1.bf16.msra.mxu0 0
      %606 = vmatprep.subr.bf16.mxu0 0
      %607 = vmatpush1.bf16.msra.mxu0 0
      %608 = vmatprep.subr.bf16.mxu0 0
      %609 = vmatpush1.bf16.msra.mxu0 0
      %610 = vmatprep.subr.bf16.mxu0 0
      %611 = vmatpush1.bf16.msra.mxu0 0
      %612 = vmatprep.subr.bf16.mxu0 0
      %613 = vmatpush1.bf16.msra.mxu0 0
      %614 = vmatprep.subr.bf16.mxu0 0
      %615 = vmatpush1.bf16.msra.mxu0 0
      %616 = vmatprep.subr.bf16.mxu0 0
      %617 = vmatpush1.bf16.msra.mxu0 0
      %618 = vmatprep.subr.bf16.mxu0 0
      %619 = vmatpush1.bf16.msra.mxu0 0
      %620 = vmatprep.subr.bf16.mxu0 0
      %621 = vmatpush1.bf16.msra.mxu0 0
      %622 = vmatprep.subr.bf16.mxu0 0
      %623 = vmatpush1.bf16.msra.mxu0 0
      %624 = vmatprep.subr.bf16.mxu0 0
      %625 = vmatpush1.bf16.msra.mxu0 0
      %626 = vmatprep.mubr.bf16.mxu0 0
      %627 = vmatmul.mubr.bf16.gmra.mrb[0].mxu0 %v589
      %v628 = vpop.f32.mrb[0].mxu0
      %v629 = vadd.f32 0.0, %v628
      %v630 = vpop.f32.mrb[0].mxu0
      %v631 = vadd.f32 0.0, %v630
      %v632 = vpop.f32.mrb[0].mxu0
      %v633 = vadd.f32 0.0, %v632
      %v634 = vpop.f32.mrb[0].mxu0
      %v635 = vadd.f32 0.0, %v634
      %636 = vmatprep.mubr.bf16.mxu0 0
      %637 = vmatmul.mubr.bf16.gmra.mrb[0].mxu0 %v592
      %v638 = vpop.f32.mrb[0].mxu0
      %v639 = vadd.f32 0.0, %v638
      %v640 = vpop.f32.mrb[0].mxu0
      %v641 = vadd.f32 0.0, %v640
      %v642 = vpop.f32.mrb[0].mxu0
      %v643 = vadd.f32 0.0, %v642
      %v644 = vpop.f32.mrb[0].mxu0
      %v645 = vadd.f32 0.0, %v644
      %646 = vdwg.mxu0
      %647 = vst [vmem:[%s262] sm:$0xff] %v629
      %648 = vst [vmem:[%s262 + $0x8] sm:$0xff] %v631
      %649 = vst [vmem:[%s262 + $0x10] sm:$0xff] %v633
      %650 = vst [vmem:[%s262 + $0x18] sm:$0xff] %v635
      %651 = vst [vmem:[%s262 + $0x20] sm:$0xff] %v639
      %652 = vst [vmem:[%s262 + $0x28] sm:$0xff] %v641
      %653 = vst [vmem:[%s262 + $0x30] sm:$0xff] %v643
      %654 = vst [vmem:[%s262 + $0x38] sm:$0xff] %v645
      %v655 = vadd.f32 %v629, %v633
      %v656 = vadd.f32 %v655, %v639
      %v657 = vadd.f32 %v656, %v643
      %v658 = vrot.slane %v657, 4
      %v659 = vadd.f32 %v657, %v658
      %v660 = vrot.slane %v659, 2
      %v661 = vadd.f32 %v659, %v660
      %v662 = vrot.slane %v661, 1
      %v663 = vadd.f32 %v661, %v662
      %v664 = vadd.f32 %v631, %v635
      %v665 = vadd.f32 %v664, %v641
      %v666 = vadd.f32 %v665, %v645
      %v667 = vrot.slane %v666, 4
      %v668 = vadd.f32 %v666, %v667
      %v669 = vrot.slane %v668, 2
      %v670 = vadd.f32 %v668, %v669
      %v671 = vrot.slane %v670, 1
      %v672 = vadd.f32 %v670, %v671
      %v673 = vld [vmem:[%s3] sm:$0xff]
      %v674 = vld [vmem:[%s3 + $0x8] sm:$0xff]
      %v675 = vld [vmem:[%s3 + $0x10] sm:$0xff]
      %v676 = vld [vmem:[%s3 + $0x18] sm:$0xff]
      %v677 = vld [vmem:[%s3 + $0x20] sm:$0xff]
      %v678 = vld [vmem:[%s3 + $0x28] sm:$0xff]
      %v679 = vld [vmem:[%s3 + $0x30] sm:$0xff]
      %v680 = vld [vmem:[%s3 + $0x38] sm:$0xff]
      %v681 = vld [vmem:[%s3 + $0x40] sm:$0xff]
      %v682 = vld [vmem:[%s3 + $0x48] sm:$0xff]
      %v683 = vld [vmem:[%s3 + $0x50] sm:$0xff]
      %v684 = vld [vmem:[%s3 + $0x58] sm:$0xff]
      %v685 = vld [vmem:[%s3 + $0x60] sm:$0xff]
      %v686 = vld [vmem:[%s3 + $0x68] sm:$0xff]
      %v687 = vld [vmem:[%s3 + $0x70] sm:$0xff]
      %v688 = vld [vmem:[%s3 + $0x78] sm:$0xff]
      %v689 = vld [vmem:[%s3 + $0x80] sm:$0xff]
      %v690 = vld [vmem:[%s3 + $0x88] sm:$0xff]
      %v691 = vld [vmem:[%s3 + $0x90] sm:$0xff]
      %v692 = vld [vmem:[%s3 + $0x98] sm:$0xff]
      %v693 = vld [vmem:[%s3 + $0xa0] sm:$0xff]
      %v694 = vld [vmem:[%s3 + $0xa8] sm:$0xff]
      %v695 = vld [vmem:[%s3 + $0xb0] sm:$0xff]
      %v696 = vld [vmem:[%s3 + $0xb8] sm:$0xff]
      %v697 = vld [vmem:[%s3 + $0xc0] sm:$0xff]
      %v698 = vld [vmem:[%s3 + $0xc8] sm:$0xff]
      %v699 = vld [vmem:[%s3 + $0xd0] sm:$0xff]
      %v700 = vld [vmem:[%s3 + $0xd8] sm:$0xff]
      %v701 = vld [vmem:[%s3 + $0xe0] sm:$0xff]
      %v702 = vld [vmem:[%s3 + $0xe8] sm:$0xff]
      %v703 = vld [vmem:[%s3 + $0xf0] sm:$0xff]
      %v704 = vld [vmem:[%s3 + $0xf8] sm:$0xff]
      %705 = vmatprep.subr.mxu0 0.0
      %706 = vmatpush1.msra.mxu0 %v673
      %707 = vmatprep.subr.mxu0 0.0
      %708 = vmatpush1.msra.mxu0 %v674
      %709 = vmatprep.subr.mxu0 0.0
      %710 = vmatpush1.msra.mxu0 %v675
      %711 = vmatprep.subr.mxu0 0.0
      %712 = vmatpush1.msra.mxu0 %v676
      %713 = vmatprep.subr.mxu0 0.0
      %714 = vmatpush1.msra.mxu0 %v677
      %715 = vmatprep.subr.mxu0 0.0
      %716 = vmatpush1.msra.mxu0 %v678
      %717 = vmatprep.subr.mxu0 0.0
      %718 = vmatpush1.msra.mxu0 %v679
      %719 = vmatprep.subr.mxu0 0.0
      %720 = vmatpush1.msra.mxu0 %v680
      %721 = vmatprep.subr.mxu0 0.0
      %722 = vmatpush1.msra.mxu0 %v681
      %723 = vmatprep.subr.mxu0 0.0
      %724 = vmatpush1.msra.mxu0 %v682
      %725 = vmatprep.subr.mxu0 0.0
      %726 = vmatpush1.msra.mxu0 %v683
      %727 = vmatprep.subr.mxu0 0.0
      %728 = vmatpush1.msra.mxu0 %v684
      %729 = vmatprep.subr.mxu0 0.0
      %730 = vmatpush1.msra.mxu0 %v685
      %731 = vmatprep.subr.mxu0 0.0
      %732 = vmatpush1.msra.mxu0 %v686
      %733 = vmatprep.subr.mxu0 0.0
      %734 = vmatpush1.msra.mxu0 %v687
      %735 = vmatprep.subr.mxu0 0.0
      %736 = vmatpush1.msra.mxu0 %v688
      %737 = vmatprep.subr.mxu0 0.0
      %738 = vmatpush1.msra.mxu0 %v689
      %739 = vmatprep.subr.mxu0 0.0
      %740 = vmatpush1.msra.mxu0 %v690
      %741 = vmatprep.subr.mxu0 0.0
      %742 = vmatpush1.msra.mxu0 %v691
      %743 = vmatprep.subr.mxu0 0.0
      %744 = vmatpush1.msra.mxu0 %v692
      %745 = vmatprep.subr.mxu0 0.0
      %746 = vmatpush1.msra.mxu0 %v693
      %747 = vmatprep.subr.mxu0 0.0
      %748 = vmatpush1.msra.mxu0 %v694
      %749 = vmatprep.subr.mxu0 0.0
      %750 = vmatpush1.msra.mxu0 %v695
      %751 = vmatprep.subr.mxu0 0.0
      %752 = vmatpush1.msra.mxu0 %v696
      %753 = vmatprep.subr.mxu0 0.0
      %754 = vmatpush1.msra.mxu0 %v697
      %755 = vmatprep.subr.mxu0 0.0
      %756 = vmatpush1.msra.mxu0 %v698
      %757 = vmatprep.subr.mxu0 0.0
      %758 = vmatpush1.msra.mxu0 %v699
      %759 = vmatprep.subr.mxu0 0.0
      %760 = vmatpush1.msra.mxu0 %v700
      %761 = vmatprep.subr.mxu0 0.0
      %762 = vmatpush1.msra.mxu0 %v701
      %763 = vmatprep.subr.mxu0 0.0
      %764 = vmatpush1.msra.mxu0 %v702
      %765 = vmatprep.subr.mxu0 0.0
      %766 = vmatpush1.msra.mxu0 %v703
      %767 = vmatprep.subr.mxu0 0.0
      %768 = vmatpush1.msra.mxu0 %v704
      %769 = vmatprep.mubr.f32.mxu0 %v672
      %770 = vmatmul.mubr.f32.gmra.mrb[0].mxu0 %v663
      %v771 = vpop.f32.mrb[0].mxu0
      %v772 = vadd.f32 0.0, %v771
      %v773 = vpop.f32.mrb[0].mxu0
      %774 = vdwg.mxu0
      %v775 = vmul.f32 %v772, 0.0009765625
      %v776 = vld [vmem:[%s4] sm:$0xff]
      %v777 = vld [vmem:[%s4 + $0x8] sm:$0xff]
      %vm778 = vcmask 64512
      %v780 = vsel %vm778, %v775, 0
      %782 = vmatprep.subr.mxu0 %v777
      %783 = vmatpush1.msra.mxu0 %v776
      %784 = vmatprep.subr.mxu0 0.0
      %785 = vmatpush1.msra.mxu0 0.0
      %786 = vmatprep.subr.mxu0 0.0
      %787 = vmatpush1.msra.mxu0 0.0
      %788 = vmatprep.subr.mxu0 0.0
      %789 = vmatpush1.msra.mxu0 0.0
      %790 = vmatprep.subr.mxu0 0.0
      %791 = vmatpush1.msra.mxu0 0.0
      %792 = vmatprep.subr.mxu0 0.0
      %793 = vmatpush1.msra.mxu0 0.0
      %794 = vmatprep.subr.mxu0 0.0
      %795 = vmatpush1.msra.mxu0 0.0
      %796 = vmatprep.subr.mxu0 0.0
      %797 = vmatpush1.msra.mxu0 0.0
      %798 = vmatprep.subr.mxu0 0.0
      %799 = vmatpush1.msra.mxu0 0.0
      %800 = vmatprep.subr.mxu0 0.0
      %801 = vmatpush1.msra.mxu0 0.0
      %802 = vmatprep.subr.mxu0 0.0
      %803 = vmatpush1.msra.mxu0 0.0
      %804 = vmatprep.subr.mxu0 0.0
      %805 = vmatpush1.msra.mxu0 0.0
      %806 = vmatprep.subr.mxu0 0.0
      %807 = vmatpush1.msra.mxu0 0.0
      %808 = vmatprep.subr.mxu0 0.0
      %809 = vmatpush1.msra.mxu0 0.0
      %810 = vmatprep.subr.mxu0 0.0
      %811 = vmatpush1.msra.mxu0 0.0
      %812 = vmatprep.subr.mxu0 0.0
      %813 = vmatpush1.msra.mxu0 0.0
      %814 = vmatprep.subr.mxu0 0.0
      %815 = vmatpush1.msra.mxu0 0.0
      %816 = vmatprep.subr.mxu0 0.0
      %817 = vmatpush1.msra.mxu0 0.0
      %818 = vmatprep.subr.mxu0 0.0
      %819 = vmatpush1.msra.mxu0 0.0
      %820 = vmatprep.subr.mxu0 0.0
      %821 = vmatpush1.msra.mxu0 0.0
      %822 = vmatprep.subr.mxu0 0.0
      %823 = vmatpush1.msra.mxu0 0.0
      %824 = vmatprep.subr.mxu0 0.0
      %825 = vmatpush1.msra.mxu0 0.0
      %826 = vmatprep.subr.mxu0 0.0
      %827 = vmatpush1.msra.mxu0 0.0
      %828 = vmatprep.subr.mxu0 0.0
      %829 = vmatpush1.msra.mxu0 0.0
      %830 = vmatprep.subr.mxu0 0.0
      %831 = vmatpush1.msra.mxu0 0.0
      %832 = vmatprep.subr.mxu0 0.0
      %833 = vmatpush1.msra.mxu0 0.0
      %834 = vmatprep.subr.mxu0 0.0
      %835 = vmatpush1.msra.mxu0 0.0
      %836 = vmatprep.subr.mxu0 0.0
      %837 = vmatpush1.msra.mxu0 0.0
      %838 = vmatprep.subr.mxu0 0.0
      %839 = vmatpush1.msra.mxu0 0.0
      %840 = vmatprep.subr.mxu0 0.0
      %841 = vmatpush1.msra.mxu0 0.0
      %842 = vmatprep.subr.mxu0 0.0
      %843 = vmatpush1.msra.mxu0 0.0
      %844 = vmatprep.subr.mxu0 0.0
      %845 = vmatpush1.msra.mxu0 0.0
      %846 = vmatprep.mubr.f32.mxu0 0.0
      %847 = vmatmul.mubr.f32.gmra.mrb[0].mxu0 %v780
      %v848 = vpop.f32.mrb[0].mxu0
      %v849 = vadd.f32 0.0, %v848
      %v850 = vpop.f32.mrb[0].mxu0
      %v851 = vadd.f32 0.0, %v850
      %852 = vdwg.mxu0
      %v853 = vlaneseq
      %v854 = vshrl.u32 %v853, 7
      %v855 = vsub.s32 0, %v854
      %v856 = vrot.slane %v849, %v855
      %v857 = vlaneseq
      %v858 = vshrl.u32 %v857, 7
      %v859 = vsub.s32 0, %v858
      %v860 = vrot.slane %v851, %v859
      %v861 = vsub.f32 %v629, %v856
      %v862 = vsub.f32 %v631, %v860
      %v863 = vsub.f32 %v633, %v856
      %v864 = vsub.f32 %v635, %v860
      %v865 = vsub.f32 %v639, %v856
      %v866 = vsub.f32 %v641, %v860
      %v867 = vsub.f32 %v643, %v856
      %v868 = vsub.f32 %v645, %v860
      %v869 = vmul.f32 %v861, %v861
      %v870 = vmul.f32 %v862, %v862
      %v871 = vmul.f32 %v863, %v863
      %v872 = vmul.f32 %v864, %v864
      %v873 = vmul.f32 %v865, %v865
      %v874 = vmul.f32 %v866, %v866
      %v875 = vmul.f32 %v867, %v867
      %v876 = vmul.f32 %v868, %v868
      %v877 = vadd.f32 %v869, %v871
      %v878 = vadd.f32 %v877, %v873
      %v879 = vadd.f32 %v878, %v875
      %v880 = vrot.slane %v879, 4
      %v881 = vadd.f32 %v879, %v880
      %v882 = vrot.slane %v881, 2
      %v883 = vadd.f32 %v881, %v882
      %v884 = vrot.slane %v883, 1
      %v885 = vadd.f32 %v883, %v884
      %v886 = vadd.f32 %v870, %v872
      %v887 = vadd.f32 %v886, %v874
      %v888 = vadd.f32 %v887, %v876
      %v889 = vrot.slane %v888, 4
      %v890 = vadd.f32 %v888, %v889
      %v891 = vrot.slane %v890, 2
      %v892 = vadd.f32 %v890, %v891
      %v893 = vrot.slane %v892, 1
      %v894 = vadd.f32 %v892, %v893
      %895 = vmatprep.subr.mxu0 0.0
      %896 = vmatpush1.msra.mxu0 %v673
      %897 = vmatprep.subr.mxu0 0.0
      %898 = vmatpush1.msra.mxu0 %v674
      %899 = vmatprep.subr.mxu0 0.0
      %900 = vmatpush1.msra.mxu0 %v675
      %901 = vmatprep.subr.mxu0 0.0
      %902 = vmatpush1.msra.mxu0 %v676
      %903 = vmatprep.subr.mxu0 0.0
      %904 = vmatpush1.msra.mxu0 %v677
      %905 = vmatprep.subr.mxu0 0.0
      %906 = vmatpush1.msra.mxu0 %v678
      %907 = vmatprep.subr.mxu0 0.0
      %908 = vmatpush1.msra.mxu0 %v679
      %909 = vmatprep.subr.mxu0 0.0
      %910 = vmatpush1.msra.mxu0 %v680
      %911 = vmatprep.subr.mxu0 0.0
      %912 = vmatpush1.msra.mxu0 %v681
      %913 = vmatprep.subr.mxu0 0.0
      %914 = vmatpush1.msra.mxu0 %v682
      %915 = vmatprep.subr.mxu0 0.0
      %916 = vmatpush1.msra.mxu0 %v683
      %917 = vmatprep.subr.mxu0 0.0
      %918 = vmatpush1.msra.mxu0 %v684
      %919 = vmatprep.subr.mxu0 0.0
      %920 = vmatpush1.msra.mxu0 %v685
      %921 = vmatprep.subr.mxu0 0.0
      %922 = vmatpush1.msra.mxu0 %v686
      %923 = vmatprep.subr.mxu0 0.0
      %924 = vmatpush1.msra.mxu0 %v687
      %925 = vmatprep.subr.mxu0 0.0
      %926 = vmatpush1.msra.mxu0 %v688
      %927 = vmatprep.subr.mxu0 0.0
      %928 = vmatpush1.msra.mxu0 %v689
      %929 = vmatprep.subr.mxu0 0.0
      %930 = vmatpush1.msra.mxu0 %v690
      %931 = vmatprep.subr.mxu0 0.0
      %932 = vmatpush1.msra.mxu0 %v691
      %933 = vmatprep.subr.mxu0 0.0
      %934 = vmatpush1.msra.mxu0 %v692
      %935 = vmatprep.subr.mxu0 0.0
      %936 = vmatpush1.msra.mxu0 %v693
      %937 = vmatprep.subr.mxu0 0.0
      %938 = vmatpush1.msra.mxu0 %v694
      %939 = vmatprep.subr.mxu0 0.0
      %940 = vmatpush1.msra.mxu0 %v695
      %941 = vmatprep.subr.mxu0 0.0
      %942 = vmatpush1.msra.mxu0 %v696
      %943 = vmatprep.subr.mxu0 0.0
      %944 = vmatpush1.msra.mxu0 %v697
      %945 = vmatprep.subr.mxu0 0.0
      %946 = vmatpush1.msra.mxu0 %v698
      %947 = vmatprep.subr.mxu0 0.0
      %948 = vmatpush1.msra.mxu0 %v699
      %949 = vmatprep.subr.mxu0 0.0
      %950 = vmatpush1.msra.mxu0 %v700
      %951 = vmatprep.subr.mxu0 0.0
      %952 = vmatpush1.msra.mxu0 %v701
      %953 = vmatprep.subr.mxu0 0.0
      %954 = vmatpush1.msra.mxu0 %v702
      %955 = vmatprep.subr.mxu0 0.0
      %956 = vmatpush1.msra.mxu0 %v703
      %957 = vmatprep.subr.mxu0 0.0
      %958 = vmatpush1.msra.mxu0 %v704
      %959 = vmatprep.mubr.f32.mxu0 %v894
      %960 = vmatmul.mubr.f32.gmra.mrb[0].mxu0 %v885
      %v961 = vpop.f32.mrb[0].mxu0
      %v962 = vadd.f32 0.0, %v961
      %v963 = vpop.f32.mrb[0].mxu0
      %964 = vdwg.mxu0
      %vm965 = vcmask 57344
      %966 = vst.msk [vmem:[%s267] sm:$0x1] %vm965, %v775
      %967 = vst.msk [vmem:[%s267 + $0x1] sm:$0x1] %vm965, %v962
      %s968 = smul.u32 4, %s18
      %p969 = scmp.lt.s32.totalorder %s968, 7
      %s970 = scalar_select %p969, %s968, 7
      %s971 = smul.addr %s970, 2
      %s972 = smul.addr %s971, 8
      %s973 = scalar_lea.vmem %s5, %s972
      %p974 = scmp.lt.s32.totalorder %s18, 1
      %s975 = scalar_select %p974, %s18, 1
      %s976 = smul.addr %s975, 2
      %s977 = scalar_lea.vmem %s6, %s976
      // Predicated region
      $region41: #{upconv_block.2} parent=39 // pred_check
        %p978 = pneg %p146
      $region42: #{upconv_block.2} parent=39 // pred_check_branch
        %980 = sbr.rel (%p978) target = $region44
      $region43: #{upconv_block.2} parent=39 // pred_region
        %s981 = smul.u32 4, %s18
      $region44: #{upconv_block.2} parent=39 // pred_fallthru
        _
      // Predicated region
      $region45: #{upconv_block.2} parent=39 // pred_check
        %p982 = pneg %p172
      $region46: #{upconv_block.2} parent=39 // pred_check_branch
        %984 = sbr.rel (%p982) target = $region48
      $region47: #{upconv_block.2} parent=39 // pred_region
        _
      $region48: #{upconv_block.2} parent=39 // pred_fallthru
        _
    $region40: #{upconv_block.2} parent=5 // pred_fallthru
      _
    %p985 = scmp.le.s32.totalorder 2, %s13
    // Predicated region
    $region49: #{upconv_block.2} parent=5 // pred_check
      %p986 = pneg %p985
    $region50: #{upconv_block.2} parent=5 // pred_check_branch
      %988 = sbr.rel (%p986) target = $region52
    $region51: #{upconv_block.2} parent=5 // pred_region
      %s989 = ssub.s32 %s13, 2
      // Predicated region
      $region53: #{upconv_block.2} parent=51 // pred_check
        %p990 = pneg %p152
      $region54: #{upconv_block.2} parent=51 // pred_check_branch
        %992 = sbr.rel (%p990) target = $region56
      $region55: #{upconv_block.2} parent=51 // pred_region
        %s993 = smul.u32 4, %s19
        %p994 = scmp.lt.s32.totalorder %s993, 7
        %s995 = scalar_select %p994, %s993, 7
        %s996 = smul.addr %s995, 2
        %s997 = smul.addr %s996, 8
        %s998 = scalar_lea.vmem %s5, %s997
      $region56: #{upconv_block.2} parent=51 // pred_fallthru
        _
      // Predicated region
      $region57: #{upconv_block.2} parent=51 // pred_check
        %p999 = pneg %p178
      $region58: #{upconv_block.2} parent=51 // pred_check_branch
        %1001 = sbr.rel (%p999) target = $region60
      $region59: #{upconv_block.2} parent=51 // pred_region
        %p1002 = scmp.lt.s32.totalorder %s19, 1
        %s1003 = scalar_select %p1002, %s19, 1
        %s1004 = smul.addr %s1003, 2
        %s1005 = scalar_lea.vmem %s6, %s1004
      $region60: #{upconv_block.2} parent=51 // pred_fallthru
        _
    $region52: #{upconv_block.2} parent=5 // pred_fallthru
      _
  $region6: #{upconv_block.2} parent=0 // loop_footer
    %s17 = sadd.s32 1, %s13
  $region7: #{upconv_block.2} parent=0 // loop_footer_branch
    %12 = sbr.rel target = $region3
  $region8: #{upconv_block.2} parent=0 // loop_exit
    _

</llo_original>
